<compile_context>
chip_gen: v5e
topology: v5e:2x2
jax: 0.10.0
libtpu: 0.0.40
codegen_flags: <defaults>
</compile_context>

<pallas_src>
from functools import partial

import jax
import jax.numpy as jnp
from jax.experimental import pallas as pl
from jax.experimental.pallas import tpu as pltpu

HEAD_LANES = 128          # lane width of the fused [mu | log_std | pad] band
GRID_BATCH_THRESHOLD = 1024
GRID_TILE_M = 512


def _round_up(n, m):
    return ((n + m - 1) // m) * m


def _policy_kernel(x_ref, w_ref, b_ref, out_ref, *, obs_rows, hidden, action_dim):
    # Static, tile-aligned views into the packed weight slab (all offsets are
    # multiples of 8 rows / 128 lanes -> zero-cost views).
    w1 = w_ref[0:obs_rows, :]                                           # [obs_rows, hidden] bf16
    w2 = w_ref[obs_rows:obs_rows + hidden, :]                           # [hidden, hidden]  bf16
    wh = w_ref[obs_rows + hidden:obs_rows + 2 * hidden, 0:HEAD_LANES]   # [hidden, 128]     bf16

    b = b_ref[...]                                                      # [3, hidden] f32
    b1 = b[0:1, :]
    b2 = b[1:2, :]
    bh = b[2:3, 0:HEAD_LANES]

    cdt = w_ref.dtype                                                   # compute dtype (bf16)
    x = x_ref[...].astype(cdt)                                          # [batch, obs_rows]

    # fc1 + ReLU  (bf16 inputs, f32 accumulate, f32 epilogue)
    h1 = jnp.dot(x, w1, preferred_element_type=jnp.float32) + b1
    h1 = jnp.maximum(h1, 0.0)

    # fc2 + ReLU
    h2 = jnp.dot(h1.astype(cdt), w2, preferred_element_type=jnp.float32) + b2
    h2 = jnp.maximum(h2, 0.0)

    # Fused heads: one narrow matmul produces [mu | log_std | pad] on 128 lanes.
    heads = jnp.dot(h2.astype(cdt), wh, preferred_element_type=jnp.float32) + bh

    # exp only on the log_std (and harmless zero-pad) lanes; mu lanes pass through.
    lane = jax.lax.broadcasted_iota(jnp.int32, heads.shape, dimension=1)
    out_ref[...] = jnp.where(lane < action_dim, heads, jnp.exp(heads)).astype(out_ref.dtype)


def pad_observations(x, obs_rows):
    """Pad observations once, outside the per-step hot path (extra lanes hit
    zero weight rows, so pad values are irrelevant)."""
    if x.shape[1] < obs_rows:
        x = jnp.pad(x, ((0, 0), (0, obs_rows - x.shape[1])))
    return x


@partial(jax.jit, static_argnames=("action_dim",))
def policy_network_forward(x, w_slab, b_slab, *, action_dim):
    """x: [batch, obs_dim or obs_rows] f32. Returns (mu, std), each [batch, action_dim] f32."""
    batch = x.shape[0]
    hidden = w_slab.shape[1]
    obs_rows = w_slab.shape[0] - 2 * hidden

    # Trace-time no-op if the caller already supplies padded observations.
    x = pad_observations(x, obs_rows)

    flops = 2 * batch * (obs_rows * hidden + hidden * hidden + hidden * HEAD_LANES)
    bytes_accessed = (x.size * x.dtype.itemsize
                      + w_slab.size * w_slab.dtype.itemsize
                      + b_slab.size * b_slab.dtype.itemsize
                      + batch * HEAD_LANES * 4)
    ce = pl.CostEstimate(flops=flops,
                         transcendentals=batch * HEAD_LANES,
                         bytes_accessed=bytes_accessed)

    kernel = partial(_policy_kernel, obs_rows=obs_rows, hidden=hidden, action_dim=action_dim)
    out_shape = jax.ShapeDtypeStruct((batch, HEAD_LANES), jnp.float32)

    if batch >= GRID_BATCH_THRESHOLD and batch % GRID_TILE_M == 0:
        # Large batch: shard rows across TensorCores (v7x megacore); weights and
        # biases map to block (0, 0) every step so they stay VMEM-resident.
        out = pl.pallas_call(
            kernel,
            out_shape=out_shape,
            grid_spec=pltpu.PrefetchScalarGridSpec(
                num_scalar_prefetch=0,
                grid=(batch // GRID_TILE_M,),
                in_specs=[
                    pl.BlockSpec((GRID_TILE_M, obs_rows), lambda i: (i, 0)),
                    pl.BlockSpec(w_slab.shape, lambda i: (0, 0)),
                    pl.BlockSpec(b_slab.shape, lambda i: (0, 0)),
                ],
                out_specs=pl.BlockSpec((GRID_TILE_M, HEAD_LANES), lambda i: (i, 0)),
            ),
            compiler_params=pltpu.CompilerParams(dimension_semantics=("parallel",)),
            cost_estimate=ce,
        )(x, w_slab, b_slab)
    else:
        # Small batch: single invocation, no grid (grid step overhead > compute).
        vmem = pl.BlockSpec(memory_space=pltpu.MemorySpace.VMEM)
        out = pl.pallas_call(
            kernel,
            out_shape=out_shape,
            in_specs=[vmem, vmem, vmem],
            out_specs=vmem,
            cost_estimate=ce,
        )(x, w_slab, b_slab)

    mu = out[:, :action_dim]
    std = out[:, action_dim:2 * action_dim]
    return mu, std


def init_params(key, obs_dim, action_dim, hidden_dim):
    """nn.Linear-style init (U[-1/sqrt(fan_in), +1/sqrt(fan_in)]).
    Weights returned already transposed to (in, out)."""
    def linear(k, fan_in, fan_out):
        kw, kb = jax.random.split(k)
        bound = 1.0 / (fan_in ** 0.5)
        w = jax.random.uniform(kw, (fan_in, fan_out), jnp.float32, -bound, bound)
        b = jax.random.uniform(kb, (fan_out,), jnp.float32, -bound, bound)
        return w, b

    k1, k2, k3, k4 = jax.random.split(key, 4)
    w1, b1 = linear(k1, obs_dim, hidden_dim)
    w2, b2 = linear(k2, hidden_dim, hidden_dim)
    wmu, bmu = linear(k3, hidden_dim, action_dim)
    wls, bls = linear(k4, hidden_dim, action_dim)
    return dict(w1=w1, b1=b1, w2=w2, b2=b2,
                wmu=wmu, bmu=bmu, wls=wls, bls=bls)


def pack_params(params, obs_dim, action_dim, hidden_dim, *, weight_dtype=jnp.bfloat16):
    """Pack all weights into one [obs_rows + 2*hidden, hidden] slab (bf16) and
    all biases into one [3, hidden] slab (f32).  The fused head [mu|log_std|0]
    lives in lanes [0, HEAD_LANES) of the last `hidden` rows."""
    assert hidden_dim % 128 == 0, "hidden_dim must be a multiple of 128"
    assert 2 * action_dim <= HEAD_LANES, "fused head must fit in a 128-lane band"
    obs_rows = _round_up(obs_dim, 128)   # lane-clean K for fc1

    w1p = jnp.zeros((obs_rows, hidden_dim), jnp.float32).at[:obs_dim, :].set(params["w1"])
    whp = jnp.zeros((hidden_dim, hidden_dim), jnp.float32)
    whp = whp.at[:, :action_dim].set(params["wmu"])
    whp = whp.at[:, action_dim:2 * action_dim].set(params["wls"])
    w_slab = jnp.concatenate([w1p, params["w2"], whp], axis=0).astype(weight_dtype)

    bhp = jnp.zeros((hidden_dim,), jnp.float32)
    bhp = bhp.at[:action_dim].set(params["bmu"])
    bhp = bhp.at[action_dim:2 * action_dim].set(params["bls"])
    b_slab = jnp.stack([params["b1"], params["b2"], bhp], axis=0)   # f32
    return w_slab, b_slab


def reference_forward(x, params):
    p = jax.lax.Precision.HIGHEST
    h1 = jnp.maximum(jnp.dot(x, params["w1"], precision=p) + params["b1"], 0.0)
    h2 = jnp.maximum(jnp.dot(h1, params["w2"], precision=p) + params["b2"], 0.0)
    mu = jnp.dot(h2, params["wmu"], precision=p) + params["bmu"]
    std = jnp.exp(jnp.dot(h2, params["wls"], precision=p) + params["bls"])
    return mu, std


if __name__ == "__main__":
    # Ant-v5: obs_dim=105, action_dim=8; module default hidden_dim=256.
    obs_dim, action_dim, hidden_dim = 105, 8, 256
    obs_rows = _round_up(obs_dim, 128)

    key = jax.random.PRNGKey(0)
    key_x, key_p = jax.random.split(key)

    params = init_params(key_p, obs_dim, action_dim, hidden_dim)
    w_slab, b_slab = pack_params(params, obs_dim, action_dim, hidden_dim)

    # bf16 weights -> relaxed tolerance vs. the f32 HIGHEST-precision reference.
    atol = rtol = 2e-2

    # --- small-batch (no-grid, single-core) path ---
    batch = 256
    x = jax.random.normal(key_x, (batch, obs_dim), jnp.float32)
    x_padded = pad_observations(x, obs_rows)           # pad once, outside the hot path
    mu, std = policy_network_forward(x_padded, w_slab, b_slab, action_dim=action_dim)
    jax.block_until_ready((mu, std))

    mu_ref, std_ref = reference_forward(x, params)
    assert mu.shape == (batch, action_dim) and std.shape == (batch, action_dim)
    assert jnp.allclose(mu, mu_ref, atol=atol, rtol=rtol)
    assert jnp.allclose(std, std_ref, atol=atol, rtol=rtol)
    assert bool(jnp.all(std > 0.0))

    # --- large-batch (parallel batch grid) path ---
    batch_big = 1024
    xb = jax.random.normal(key_x, (batch_big, obs_dim), jnp.float32)
    mu_b, std_b = policy_network_forward(pad_observations(xb, obs_rows), w_slab, b_slab,
                                         action_dim=action_dim)
    jax.block_until_ready((mu_b, std_b))
    mu_b_ref, std_b_ref = reference_forward(xb, params)
    assert jnp.allclose(mu_b, mu_b_ref, atol=atol, rtol=rtol)
    assert jnp.allclose(std_b, std_b_ref, atol=atol, rtol=rtol)
    assert bool(jnp.all(std_b > 0.0))

    # TODO(synk): optional further fusion of action sampling / log-prob
    # (pltpu.prng_seed + prng_random_bits) into the epilogue to save launches.
    print("KERNEL_OK")
</pallas_src>

<mosaic_0001>
module attributes {stable_mosaic.version = 11 : i64} {
  func.func @_policy_kernel(%arg0: memref<256x128xf32, #tpu.memory_space<vmem>>, %arg1: memref<640x256xbf16, #tpu.memory_space<vmem>>, %arg2: memref<3x256xf32, #tpu.memory_space<vmem>>, %arg3: memref<256x128xf32, #tpu.memory_space<vmem>>) attributes {dimension_semantics = [], scalar_prefetch = 0 : i64, scratch_operands = 0 : i64, tpu.core_type = #tpu.core_type<tc>} {
    %c0 = arith.constant 0 : index
    %c0_0 = arith.constant 0 : index
    %0 = vector.load %arg1[%c0, %c0_0] : memref<640x256xbf16, #tpu.memory_space<vmem>>, vector<128x256xbf16>
    %c128 = arith.constant 128 : index
    %c0_1 = arith.constant 0 : index
    %1 = vector.load %arg1[%c128, %c0_1] : memref<640x256xbf16, #tpu.memory_space<vmem>>, vector<256x256xbf16>
    %c384 = arith.constant 384 : index
    %c0_2 = arith.constant 0 : index
    %2 = vector.load %arg1[%c384, %c0_2] : memref<640x256xbf16, #tpu.memory_space<vmem>>, vector<256x128xbf16>
    %c0_3 = arith.constant 0 : index
    %c0_4 = arith.constant 0 : index
    %3 = vector.load %arg2[%c0_3, %c0_4] : memref<3x256xf32, #tpu.memory_space<vmem>>, vector<3x256xf32>
    %4 = vector.extract_strided_slice %3 {offsets = [0, 0], sizes = [1, 256], strides = [1, 1]} : vector<3x256xf32> to vector<1x256xf32>
    %5 = vector.extract_strided_slice %3 {offsets = [1, 0], sizes = [1, 256], strides = [1, 1]} : vector<3x256xf32> to vector<1x256xf32>
    %6 = vector.extract_strided_slice %3 {offsets = [2, 0], sizes = [1, 128], strides = [1, 1]} : vector<3x256xf32> to vector<1x128xf32>
    %c0_5 = arith.constant 0 : index
    %c0_6 = arith.constant 0 : index
    %7 = vector.load %arg0[%c0_5, %c0_6] : memref<256x128xf32, #tpu.memory_space<vmem>>, vector<256x128xf32>
    %8 = arith.truncf %7 : vector<256x128xf32> to vector<256x128xbf16>
    %cst = arith.constant dense<0.000000e+00> : vector<256x256xf32>
    %9 = tpu.matmul %8, %0, %cst {dimension_numbers = #tpu.dot_dimension_numbers<[1], [0], [0], [1], [0, 0, 1, 1], [], []>} : vector<256x128xbf16>, vector<128x256xbf16>, vector<256x256xf32> -> vector<256x256xf32>
    %10 = vector.broadcast %4 : vector<1x256xf32> to vector<256x256xf32>
    %11 = arith.addf %9, %10 : vector<256x256xf32>
    %cst_7 = arith.constant 0.000000e+00 : f32
    %12 = vector.broadcast %cst_7 : f32 to vector<256x256xf32>
    %13 = arith.maximumf %11, %12 : vector<256x256xf32>
    %14 = arith.truncf %13 : vector<256x256xf32> to vector<256x256xbf16>
    %cst_8 = arith.constant dense<0.000000e+00> : vector<256x256xf32>
    %15 = tpu.matmul %14, %1, %cst_8 {dimension_numbers = #tpu.dot_dimension_numbers<[1], [0], [0], [1], [0, 0, 1, 1], [], []>} : vector<256x256xbf16>, vector<256x256xbf16>, vector<256x256xf32> -> vector<256x256xf32>
    %16 = vector.broadcast %5 : vector<1x256xf32> to vector<256x256xf32>
    %17 = arith.addf %15, %16 : vector<256x256xf32>
    %cst_9 = arith.constant 0.000000e+00 : f32
    %18 = vector.broadcast %cst_9 : f32 to vector<256x256xf32>
    %19 = arith.maximumf %17, %18 : vector<256x256xf32>
    %20 = arith.truncf %19 : vector<256x256xf32> to vector<256x256xbf16>
    %cst_10 = arith.constant dense<0.000000e+00> : vector<256x128xf32>
    %21 = tpu.matmul %20, %2, %cst_10 {dimension_numbers = #tpu.dot_dimension_numbers<[1], [0], [0], [1], [0, 0, 1, 1], [], []>} : vector<256x256xbf16>, vector<256x128xbf16>, vector<256x128xf32> -> vector<256x128xf32>
    %22 = vector.broadcast %6 : vector<1x128xf32> to vector<256x128xf32>
    %23 = arith.addf %21, %22 : vector<256x128xf32>
    %24 = tpu.iota {dimensions = array<i32: 1>} : vector<256x128xi32>
    %c8_i32 = arith.constant 8 : i32
    %25 = vector.broadcast %c8_i32 : i32 to vector<256x128xi32>
    %26 = arith.cmpi slt, %24, %25 : vector<256x128xi32>
    %27 = math.exp %23 : vector<256x128xf32>
    %28 = arith.select %26, %23, %27 : vector<256x128xi1>, vector<256x128xf32>
    %c0_11 = arith.constant 0 : index
    %c0_12 = arith.constant 0 : index
    %29 = vector.load %arg3[%c0_11, %c0_12] : memref<256x128xf32, #tpu.memory_space<vmem>>, vector<256x128xf32>
    tpu.vector_store %arg3[%c0_11, %c0_12], %28 {strides = array<i32>} : memref<256x128xf32, #tpu.memory_space<vmem>>, vector<256x128xf32>,
    return
  }
}

</mosaic_0001>

<llo_original>
// kernel: policy_network_forward.1
$region0: #{policy_network_forward.1}
  #allocation0 [shape = 'u32[]', space=smem, size = 0x4, offset = 0x4, fixed_abs, tag = 'smem constant byte address 0x4 - core index']
  #allocation1 [shape = 'u32[72,128]{1,0:T(1,128)}', space=vmem, size = 0x9000, scoped, tag = 'internal scratch']
  %s0 = inlined_call_operand.hbm [shape: f32[256,128], index: 0, kind: input, shape index: {}]
  %s1 = inlined_call_operand.hbm [shape: bf16[640,256], index: 1, kind: input, shape index: {}]
  %s2 = inlined_call_operand.hbm [shape: f32[3,256], index: 2, kind: input, shape index: {}]
  %s3 = inlined_call_operand.vmem [shape: f32[256,128], index: 3, kind: output, shape index: {}]
  %s4 = sld [smem:[#allocation0]]
  $region34: #{policy_network_forward.1} parent=0
    _
  %s6 = ssub.s32 1, %s4
  %s7 = scalar_select 0, %s6, %s4
  $region1: #{policy_network_forward.1} parent=0
    #allocation2 [shape = 'u8[131072]{0}', space=vmem, size = 0x20000, scoped, tag = 'input window, operand 0, single buffered']
    #allocation3 [shape = 's32[1]{0}', space=sflag, size = 0x4, scoped, tag = 'scoped memory for policy_network_forward.1']
    #allocation4 [shape = 'u8[327680]{0}', space=vmem, size = 0x50000, scoped, tag = 'input window, operand 1, single buffered']
    #allocation5 [shape = 's32[1]{0}', space=sflag, size = 0x4, scoped, tag = 'scoped memory for policy_network_forward.1']
    #allocation6 [shape = 'u8[4096]{0}', space=vmem, size = 0x1000, scoped, tag = 'input window, operand 2, single buffered']
    %8 = vsyncpa [#allocation3], 0
    %9 = vsyncpa [#allocation5], 0
    // Predicated region
    $region2: #{policy_network_forward.1} parent=1 // pred_check
      _
    $region3: #{policy_network_forward.1} parent=1 // pred_check_branch
      %11 = sbr.rel (0) target = $region5
    $region4: #{policy_network_forward.1} parent=1 // pred_region
      %13 = vsyncadd [#allocation3], 0
      %s14 = sshll.u32 %s0, 4
      %s15 = int_to_ptr.hbm [resolvable:$true] %s14
      %s16 = sshll.u32 [#allocation2], 4
      %s17 = int_to_ptr.vmem [resolvable:$true] %s16
      %22 = dma.hbm_to_vmem [thread:$0]  %s15, 4096, %s17, [#allocation3], 128, 128, 8
    $region5: #{policy_network_forward.1} parent=1 // pred_fallthru
      _
    // Predicated region
    $region6: #{policy_network_forward.1} parent=1 // pred_check
      _
    $region7: #{policy_network_forward.1} parent=1 // pred_check_branch
      %24 = sbr.rel (0) target = $region9
    $region8: #{policy_network_forward.1} parent=1 // pred_region
      %26 = vsyncadd [#allocation5], 0
      %s27 = sshll.u32 %s1, 4
      %s28 = int_to_ptr.hbm [resolvable:$true] %s27
      %s29 = sshll.u32 [#allocation4], 4
      %s30 = int_to_ptr.vmem [resolvable:$true] %s29
      %35 = dma.hbm_to_vmem [thread:$0]  %s28, 10240, %s30, [#allocation5], 128, 128, 8
    $region9: #{policy_network_forward.1} parent=1 // pred_fallthru
      _
    // Predicated region
    $region10: #{policy_network_forward.1} parent=1 // pred_check
      _
    $region11: #{policy_network_forward.1} parent=1 // pred_check_branch
      %37 = sbr.rel (0) target = $region13
    $region12: #{policy_network_forward.1} parent=1 // pred_region
      %39 = vsyncadd [#allocation5], 0
      %s41 = sshll.u32 %s2, 4
      %s42 = int_to_ptr.hbm [resolvable:$true] %s41
      %s43 = sshll.u32 [#allocation6], 4
      %s44 = int_to_ptr.vmem [resolvable:$true] %s43
      %46 = dma.hbm_to_vmem [thread:$0]  %s42, 128, %s44, [#allocation5]
    $region13: #{policy_network_forward.1} parent=1 // pred_fallthru
      _
    // Predicated region
    $region14: #{policy_network_forward.1} parent=1 // pred_check
      _
    $region15: #{policy_network_forward.1} parent=1 // pred_check_branch
      %48 = sbr.rel (0) target = $region17
    $region16: #{policy_network_forward.1} parent=1 // pred_region
      %50 = dma.done [#allocation3], 4096
    $region17: #{policy_network_forward.1} parent=1 // pred_fallthru
      _
    // Predicated region
    $region18: #{policy_network_forward.1} parent=1 // pred_check
      _
    $region19: #{policy_network_forward.1} parent=1 // pred_check_branch
      %52 = sbr.rel (0) target = $region21
    $region20: #{policy_network_forward.1} parent=1 // pred_region
      %54 = dma.done [#allocation5], 10240
    $region21: #{policy_network_forward.1} parent=1 // pred_fallthru
      _
    // Predicated region
    $region22: #{policy_network_forward.1} parent=1 // pred_check
      _
    $region23: #{policy_network_forward.1} parent=1 // pred_check_branch
      %56 = sbr.rel (0) target = $region25
    $region24: #{policy_network_forward.1} parent=1 // pred_region
      %58 = dma.done [#allocation5], 128
    $region25: #{policy_network_forward.1} parent=1 // pred_fallthru
      _
    %v59 = vld [vmem:[#allocation4] sm:$0xff]
    %v60 = vld [vmem:[#allocation4 + $0x8] sm:$0xff]
    %v61 = vld [vmem:[#allocation4 + $0x10] sm:$0xff]
    %v62 = vld [vmem:[#allocation4 + $0x18] sm:$0xff]
    %v63 = vld [vmem:[#allocation4 + $0x20] sm:$0xff]
    %v64 = vld [vmem:[#allocation4 + $0x28] sm:$0xff]
    %v65 = vld [vmem:[#allocation4 + $0x30] sm:$0xff]
    %v66 = vld [vmem:[#allocation4 + $0x38] sm:$0xff]
    %v67 = vld [vmem:[#allocation4 + $0x40] sm:$0xff]
    %v68 = vld [vmem:[#allocation4 + $0x48] sm:$0xff]
    %v69 = vld [vmem:[#allocation4 + $0x50] sm:$0xff]
    %v70 = vld [vmem:[#allocation4 + $0x58] sm:$0xff]
    %v71 = vld [vmem:[#allocation4 + $0x60] sm:$0xff]
    %v72 = vld [vmem:[#allocation4 + $0x68] sm:$0xff]
    %v73 = vld [vmem:[#allocation4 + $0x70] sm:$0xff]
    %v74 = vld [vmem:[#allocation4 + $0x78] sm:$0xff]
    %v75 = vld [vmem:[#allocation4 + $0x80] sm:$0xff]
    %v76 = vld [vmem:[#allocation4 + $0x88] sm:$0xff]
    %v77 = vld [vmem:[#allocation4 + $0x90] sm:$0xff]
    %v78 = vld [vmem:[#allocation4 + $0x98] sm:$0xff]
    %v79 = vld [vmem:[#allocation4 + $0xa0] sm:$0xff]
    %v80 = vld [vmem:[#allocation4 + $0xa8] sm:$0xff]
    %v81 = vld [vmem:[#allocation4 + $0xb0] sm:$0xff]
    %v82 = vld [vmem:[#allocation4 + $0xb8] sm:$0xff]
    %v83 = vld [vmem:[#allocation4 + $0xc0] sm:$0xff]
    %v84 = vld [vmem:[#allocation4 + $0xc8] sm:$0xff]
    %v85 = vld [vmem:[#allocation4 + $0xd0] sm:$0xff]
    %v86 = vld [vmem:[#allocation4 + $0xd8] sm:$0xff]
    %v87 = vld [vmem:[#allocation4 + $0xe0] sm:$0xff]
    %v88 = vld [vmem:[#allocation4 + $0xe8] sm:$0xff]
    %v89 = vld [vmem:[#allocation4 + $0xf0] sm:$0xff]
    %v90 = vld [vmem:[#allocation4 + $0xf8] sm:$0xff]
    %v91 = vld [vmem:[#allocation4 + $0x100] sm:$0xff]
    %v92 = vld [vmem:[#allocation4 + $0x108] sm:$0xff]
    %v93 = vld [vmem:[#allocation4 + $0x110] sm:$0xff]
    %v94 = vld [vmem:[#allocation4 + $0x118] sm:$0xff]
    %v95 = vld [vmem:[#allocation4 + $0x120] sm:$0xff]
    %v96 = vld [vmem:[#allocation4 + $0x128] sm:$0xff]
    %v97 = vld [vmem:[#allocation4 + $0x130] sm:$0xff]
    %v98 = vld [vmem:[#allocation4 + $0x138] sm:$0xff]
    %v99 = vld [vmem:[#allocation4 + $0x140] sm:$0xff]
    %v100 = vld [vmem:[#allocation4 + $0x148] sm:$0xff]
    %v101 = vld [vmem:[#allocation4 + $0x150] sm:$0xff]
    %v102 = vld [vmem:[#allocation4 + $0x158] sm:$0xff]
    %v103 = vld [vmem:[#allocation4 + $0x160] sm:$0xff]
    %v104 = vld [vmem:[#allocation4 + $0x168] sm:$0xff]
    %v105 = vld [vmem:[#allocation4 + $0x170] sm:$0xff]
    %v106 = vld [vmem:[#allocation4 + $0x178] sm:$0xff]
    %v107 = vld [vmem:[#allocation4 + $0x180] sm:$0xf]
    %v108 = vld [vmem:[#allocation4 + $0x188] sm:$0xf]
    %v109 = vld [vmem:[#allocation4 + $0x190] sm:$0xf]
    %v110 = vld [vmem:[#allocation4 + $0x198] sm:$0xf]
    %v111 = vld [vmem:[#allocation4 + $0x1a0] sm:$0xf]
    %v112 = vld [vmem:[#allocation4 + $0x1a8] sm:$0xf]
    %v113 = vld [vmem:[#allocation4 + $0x1b0] sm:$0xf]
    %v114 = vld [vmem:[#allocation4 + $0x1b8] sm:$0xf]
    %v115 = vld [vmem:[#allocation4 + $0x1c0] sm:$0xf]
    %v116 = vld [vmem:[#allocation4 + $0x1c8] sm:$0xf]
    %v117 = vld [vmem:[#allocation4 + $0x1d0] sm:$0xf]
    %v118 = vld [vmem:[#allocation4 + $0x1d8] sm:$0xf]
    %v119 = vld [vmem:[#allocation4 + $0x1e0] sm:$0xf]
    %v120 = vld [vmem:[#allocation4 + $0x1e8] sm:$0xf]
    %v121 = vld [vmem:[#allocation4 + $0x1f0] sm:$0xf]
    %v122 = vld [vmem:[#allocation4 + $0x1f8] sm:$0xf]
    %v123 = vld [vmem:[#allocation4 + $0x200] sm:$0xf]
    %v124 = vld [vmem:[#allocation4 + $0x208] sm:$0xf]
    %v125 = vld [vmem:[#allocation4 + $0x210] sm:$0xf]
    %v126 = vld [vmem:[#allocation4 + $0x218] sm:$0xf]
    %v127 = vld [vmem:[#allocation4 + $0x220] sm:$0xf]
    %v128 = vld [vmem:[#allocation4 + $0x228] sm:$0xf]
    %v129 = vld [vmem:[#allocation4 + $0x230] sm:$0xf]
    %v130 = vld [vmem:[#allocation4 + $0x238] sm:$0xf]
    %v131 = vld [vmem:[#allocation4 + $0x240] sm:$0xf]
    %v132 = vld [vmem:[#allocation4 + $0x248] sm:$0xf]
    %v133 = vld [vmem:[#allocation4 + $0x250] sm:$0xf]
    %v134 = vld [vmem:[#allocation4 + $0x258] sm:$0xf]
    %v135 = vld [vmem:[#allocation4 + $0x260] sm:$0xf]
    %v136 = vld [vmem:[#allocation4 + $0x268] sm:$0xf]
    %v137 = vld [vmem:[#allocation4 + $0x270] sm:$0xf]
    %v138 = vld [vmem:[#allocation4 + $0x278] sm:$0xf]
    %v139 = vld [vmem:[#allocation6] sm:$0x77]
    %v140 = vld [vmem:[#allocation2] sm:$0xff]
    %v141 = vld [vmem:[#allocation2 + $0x8] sm:$0xff]
    %v142 = vld [vmem:[#allocation2 + $0x10] sm:$0xff]
    %v143 = vld [vmem:[#allocation2 + $0x18] sm:$0xff]
    %v144 = vld [vmem:[#allocation2 + $0x20] sm:$0xff]
    %v145 = vld [vmem:[#allocation2 + $0x28] sm:$0xff]
    %v146 = vld [vmem:[#allocation2 + $0x30] sm:$0xff]
    %v147 = vld [vmem:[#allocation2 + $0x38] sm:$0xff]
    %v148 = vld [vmem:[#allocation2 + $0x40] sm:$0xff]
    %v149 = vld [vmem:[#allocation2 + $0x48] sm:$0xff]
    %v150 = vld [vmem:[#allocation2 + $0x50] sm:$0xff]
    %v151 = vld [vmem:[#allocation2 + $0x58] sm:$0xff]
    %v152 = vld [vmem:[#allocation2 + $0x60] sm:$0xff]
    %v153 = vld [vmem:[#allocation2 + $0x68] sm:$0xff]
    %v154 = vld [vmem:[#allocation2 + $0x70] sm:$0xff]
    %v155 = vld [vmem:[#allocation2 + $0x78] sm:$0xff]
    %v156 = vld [vmem:[#allocation2 + $0x80] sm:$0xff]
    %v157 = vld [vmem:[#allocation2 + $0x88] sm:$0xff]
    %v158 = vld [vmem:[#allocation2 + $0x90] sm:$0xff]
    %v159 = vld [vmem:[#allocation2 + $0x98] sm:$0xff]
    %v160 = vld [vmem:[#allocation2 + $0xa0] sm:$0xff]
    %v161 = vld [vmem:[#allocation2 + $0xa8] sm:$0xff]
    %v162 = vld [vmem:[#allocation2 + $0xb0] sm:$0xff]
    %v163 = vld [vmem:[#allocation2 + $0xb8] sm:$0xff]
    %v164 = vld [vmem:[#allocation2 + $0xc0] sm:$0xff]
    %v165 = vld [vmem:[#allocation2 + $0xc8] sm:$0xff]
    %v166 = vld [vmem:[#allocation2 + $0xd0] sm:$0xff]
    %v167 = vld [vmem:[#allocation2 + $0xd8] sm:$0xff]
    %v168 = vld [vmem:[#allocation2 + $0xe0] sm:$0xff]
    %v169 = vld [vmem:[#allocation2 + $0xe8] sm:$0xff]
    %v170 = vld [vmem:[#allocation2 + $0xf0] sm:$0xff]
    %v171 = vld [vmem:[#allocation2 + $0xf8] sm:$0xff]
    %v172 = vpack.c.bf16 %v141, %v140
    %v173 = vpack.c.bf16 %v143, %v142
    %v174 = vpack.c.bf16 %v145, %v144
    %v175 = vpack.c.bf16 %v147, %v146
    %v176 = vpack.c.bf16 %v149, %v148
    %v177 = vpack.c.bf16 %v151, %v150
    %v178 = vpack.c.bf16 %v153, %v152
    %v179 = vpack.c.bf16 %v155, %v154
    %v180 = vpack.c.bf16 %v157, %v156
    %v181 = vpack.c.bf16 %v159, %v158
    %v182 = vpack.c.bf16 %v161, %v160
    %v183 = vpack.c.bf16 %v163, %v162
    %v184 = vpack.c.bf16 %v165, %v164
    %v185 = vpack.c.bf16 %v167, %v166
    %v186 = vpack.c.bf16 %v169, %v168
    %v187 = vpack.c.bf16 %v171, %v170
    %v189 = vperm.slane %v139, 0
    %v190 = vperm.slane %v139, 4
    %v193 = vperm.slane %v189, 0
    %v194 = vperm.slane %v190, 0
    %v211 = vunpack.c.l.b16 %v59
    %v212 = vunpack.c.h.b16 %v59
    %v213 = vunpack.c.l.b16 %v60
    %v214 = vunpack.c.h.b16 %v60
    %v215 = vunpack.c.l.b16 %v61
    %v216 = vunpack.c.h.b16 %v61
    %v217 = vunpack.c.l.b16 %v62
    %v218 = vunpack.c.h.b16 %v62
    %v219 = vunpack.c.l.b16 %v63
    %v220 = vunpack.c.h.b16 %v63
    %v221 = vunpack.c.l.b16 %v64
    %v222 = vunpack.c.h.b16 %v64
    %v223 = vunpack.c.l.b16 %v65
    %v224 = vunpack.c.h.b16 %v65
    %v225 = vunpack.c.l.b16 %v66
    %v226 = vunpack.c.h.b16 %v66
    %v227 = vunpack.c.l.b16 %v67
    %v228 = vunpack.c.h.b16 %v67
    %v229 = vunpack.c.l.b16 %v68
    %v230 = vunpack.c.h.b16 %v68
    %v231 = vunpack.c.l.b16 %v69
    %v232 = vunpack.c.h.b16 %v69
    %v233 = vunpack.c.l.b16 %v70
    %v234 = vunpack.c.h.b16 %v70
    %v235 = vunpack.c.l.b16 %v71
    %v236 = vunpack.c.h.b16 %v71
    %v237 = vunpack.c.l.b16 %v72
    %v238 = vunpack.c.h.b16 %v72
    %v239 = vunpack.c.l.b16 %v73
    %v240 = vunpack.c.h.b16 %v73
    %v241 = vunpack.c.l.b16 %v74
    %v242 = vunpack.c.h.b16 %v74
    %v243 = vpack.c.b16 %v213, %v211
    %v244 = vpack.c.b16 %v214, %v212
    %v245 = vpack.c.b16 %v217, %v215
    %v246 = vpack.c.b16 %v218, %v216
    %v247 = vpack.c.b16 %v221, %v219
    %v248 = vpack.c.b16 %v222, %v220
    %v249 = vpack.c.b16 %v225, %v223
    %v250 = vpack.c.b16 %v226, %v224
    %v251 = vpack.c.b16 %v229, %v227
    %v252 = vpack.c.b16 %v230, %v228
    %v253 = vpack.c.b16 %v233, %v231
    %v254 = vpack.c.b16 %v234, %v232
    %v255 = vpack.c.b16 %v237, %v235
    %v256 = vpack.c.b16 %v238, %v236
    %v257 = vpack.c.b16 %v241, %v239
    %v258 = vpack.c.b16 %v242, %v240
    %275 = vmatpush.bf16.msra.mxu0 %v257
    %276 = vmatpush.bf16.msra.mxu0 %v255
    %277 = vmatpush.bf16.msra.mxu0 %v253
    %278 = vmatpush.bf16.msra.mxu0 %v251
    %279 = vmatpush.bf16.msra.mxu0 %v249
    %280 = vmatpush.bf16.msra.mxu0 %v247
    %281 = vmatpush.bf16.msra.mxu0 %v245
    %282 = vmatpush.bf16.msra.mxu0 %v243
    %283 = vmatmul.bf16.gmra.mxu0 %v172
    %v284 = vpop.f32.mrf.mxu0
    %v285 = vadd.f32 %v193, %v284
    %v286 = vpop.f32.mrf.mxu0
    %v287 = vadd.f32 %v193, %v286
    %288 = vmatmul.bf16.gmra.mxu0 %v173
    %v289 = vpop.f32.mrf.mxu0
    %v290 = vadd.f32 %v193, %v289
    %v291 = vpop.f32.mrf.mxu0
    %v292 = vadd.f32 %v193, %v291
    %293 = vmatmul.bf16.gmra.mxu0 %v174
    %v294 = vpop.f32.mrf.mxu0
    %v295 = vadd.f32 %v193, %v294
    %v296 = vpop.f32.mrf.mxu0
    %v297 = vadd.f32 %v193, %v296
    %298 = vmatmul.bf16.gmra.mxu0 %v175
    %v299 = vpop.f32.mrf.mxu0
    %v300 = vadd.f32 %v193, %v299
    %v301 = vpop.f32.mrf.mxu0
    %v302 = vadd.f32 %v193, %v301
    %303 = vmatmul.bf16.gmra.mxu0 %v176
    %v304 = vpop.f32.mrf.mxu0
    %v305 = vadd.f32 %v193, %v304
    %v306 = vpop.f32.mrf.mxu0
    %v307 = vadd.f32 %v193, %v306
    %308 = vmatmul.bf16.gmra.mxu0 %v177
    %v309 = vpop.f32.mrf.mxu0
    %v310 = vadd.f32 %v193, %v309
    %v311 = vpop.f32.mrf.mxu0
    %v312 = vadd.f32 %v193, %v311
    %313 = vmatmul.bf16.gmra.mxu0 %v178
    %v314 = vpop.f32.mrf.mxu0
    %v315 = vadd.f32 %v193, %v314
    %v316 = vpop.f32.mrf.mxu0
    %v317 = vadd.f32 %v193, %v316
    %318 = vmatmul.bf16.gmra.mxu0 %v179
    %v319 = vpop.f32.mrf.mxu0
    %v320 = vadd.f32 %v193, %v319
    %v321 = vpop.f32.mrf.mxu0
    %v322 = vadd.f32 %v193, %v321
    %323 = vmatmul.bf16.gmra.mxu0 %v180
    %v324 = vpop.f32.mrf.mxu0
    %v325 = vadd.f32 %v193, %v324
    %v326 = vpop.f32.mrf.mxu0
    %v327 = vadd.f32 %v193, %v326
    %328 = vmatmul.bf16.gmra.mxu0 %v181
    %v329 = vpop.f32.mrf.mxu0
    %v330 = vadd.f32 %v193, %v329
    %v331 = vpop.f32.mrf.mxu0
    %v332 = vadd.f32 %v193, %v331
    %333 = vmatmul.bf16.gmra.mxu0 %v182
    %v334 = vpop.f32.mrf.mxu0
    %v335 = vadd.f32 %v193, %v334
    %v336 = vpop.f32.mrf.mxu0
    %v337 = vadd.f32 %v193, %v336
    %338 = vmatmul.bf16.gmra.mxu0 %v183
    %v339 = vpop.f32.mrf.mxu0
    %v340 = vadd.f32 %v193, %v339
    %v341 = vpop.f32.mrf.mxu0
    %v342 = vadd.f32 %v193, %v341
    %343 = vmatmul.bf16.gmra.mxu0 %v184
    %v344 = vpop.f32.mrf.mxu0
    %v345 = vadd.f32 %v193, %v344
    %v346 = vpop.f32.mrf.mxu0
    %v347 = vadd.f32 %v193, %v346
    %348 = vmatmul.bf16.gmra.mxu0 %v185
    %v349 = vpop.f32.mrf.mxu0
    %v350 = vadd.f32 %v193, %v349
    %v351 = vpop.f32.mrf.mxu0
    %v352 = vadd.f32 %v193, %v351
    %353 = vmatmul.bf16.gmra.mxu0 %v186
    %v354 = vpop.f32.mrf.mxu0
    %v355 = vadd.f32 %v193, %v354
    %v356 = vpop.f32.mrf.mxu0
    %v357 = vadd.f32 %v193, %v356
    %358 = vmatmul.bf16.gmra.mxu0 %v187
    %v359 = vpop.f32.mrf.mxu0
    %v360 = vadd.f32 %v193, %v359
    %v361 = vpop.f32.mrf.mxu0
    %v362 = vadd.f32 %v193, %v361
    %363 = vdwg.mxu0
    %364 = vmatpush.bf16.msra.mxu0 %v258
    %365 = vmatpush.bf16.msra.mxu0 %v256
    %366 = vmatpush.bf16.msra.mxu0 %v254
    %367 = vmatpush.bf16.msra.mxu0 %v252
    %368 = vmatpush.bf16.msra.mxu0 %v250
    %369 = vmatpush.bf16.msra.mxu0 %v248
    %370 = vmatpush.bf16.msra.mxu0 %v246
    %371 = vmatpush.bf16.msra.mxu0 %v244
    %372 = vmatmul.bf16.gmra.mxu0 %v172
    %v373 = vpop.f32.mrf.mxu0
    %v374 = vadd.f32 %v194, %v373
    %v375 = vpop.f32.mrf.mxu0
    %v376 = vadd.f32 %v194, %v375
    %377 = vmatmul.bf16.gmra.mxu0 %v173
    %v378 = vpop.f32.mrf.mxu0
    %v379 = vadd.f32 %v194, %v378
    %v380 = vpop.f32.mrf.mxu0
    %v381 = vadd.f32 %v194, %v380
    %382 = vmatmul.bf16.gmra.mxu0 %v174
    %v383 = vpop.f32.mrf.mxu0
    %v384 = vadd.f32 %v194, %v383
    %v385 = vpop.f32.mrf.mxu0
    %v386 = vadd.f32 %v194, %v385
    %387 = vmatmul.bf16.gmra.mxu0 %v175
    %v388 = vpop.f32.mrf.mxu0
    %v389 = vadd.f32 %v194, %v388
    %v390 = vpop.f32.mrf.mxu0
    %v391 = vadd.f32 %v194, %v390
    %392 = vmatmul.bf16.gmra.mxu0 %v176
    %v393 = vpop.f32.mrf.mxu0
    %v394 = vadd.f32 %v194, %v393
    %v395 = vpop.f32.mrf.mxu0
    %v396 = vadd.f32 %v194, %v395
    %397 = vmatmul.bf16.gmra.mxu0 %v177
    %v398 = vpop.f32.mrf.mxu0
    %v399 = vadd.f32 %v194, %v398
    %v400 = vpop.f32.mrf.mxu0
    %v401 = vadd.f32 %v194, %v400
    %402 = vmatmul.bf16.gmra.mxu0 %v178
    %v403 = vpop.f32.mrf.mxu0
    %v404 = vadd.f32 %v194, %v403
    %v405 = vpop.f32.mrf.mxu0
    %v406 = vadd.f32 %v194, %v405
    %407 = vmatmul.bf16.gmra.mxu0 %v179
    %v408 = vpop.f32.mrf.mxu0
    %v409 = vadd.f32 %v194, %v408
    %v410 = vpop.f32.mrf.mxu0
    %v411 = vadd.f32 %v194, %v410
    %412 = vmatmul.bf16.gmra.mxu0 %v180
    %v413 = vpop.f32.mrf.mxu0
    %v414 = vadd.f32 %v194, %v413
    %v415 = vpop.f32.mrf.mxu0
    %v416 = vadd.f32 %v194, %v415
    %417 = vmatmul.bf16.gmra.mxu0 %v181
    %v418 = vpop.f32.mrf.mxu0
    %v419 = vadd.f32 %v194, %v418
    %v420 = vpop.f32.mrf.mxu0
    %v421 = vadd.f32 %v194, %v420
    %422 = vmatmul.bf16.gmra.mxu0 %v182
    %v423 = vpop.f32.mrf.mxu0
    %v424 = vadd.f32 %v194, %v423
    %v425 = vpop.f32.mrf.mxu0
    %v426 = vadd.f32 %v194, %v425
    %427 = vmatmul.bf16.gmra.mxu0 %v183
    %v428 = vpop.f32.mrf.mxu0
    %v429 = vadd.f32 %v194, %v428
    %v430 = vpop.f32.mrf.mxu0
    %v431 = vadd.f32 %v194, %v430
    %432 = vmatmul.bf16.gmra.mxu0 %v184
    %v433 = vpop.f32.mrf.mxu0
    %v434 = vadd.f32 %v194, %v433
    %v435 = vpop.f32.mrf.mxu0
    %v436 = vadd.f32 %v194, %v435
    %437 = vmatmul.bf16.gmra.mxu0 %v185
    %v438 = vpop.f32.mrf.mxu0
    %v439 = vadd.f32 %v194, %v438
    %v440 = vpop.f32.mrf.mxu0
    %v441 = vadd.f32 %v194, %v440
    %442 = vmatmul.bf16.gmra.mxu0 %v186
    %v443 = vpop.f32.mrf.mxu0
    %v444 = vadd.f32 %v194, %v443
    %v445 = vpop.f32.mrf.mxu0
    %v446 = vadd.f32 %v194, %v445
    %447 = vmatmul.bf16.gmra.mxu0 %v187
    %v448 = vpop.f32.mrf.mxu0
    %v449 = vadd.f32 %v194, %v448
    %v450 = vpop.f32.mrf.mxu0
    %v451 = vadd.f32 %v194, %v450
    %452 = vdwg.mxu0
    %v453 = vmax.f32 %v285, 0.0
    %v454 = vmax.f32 %v374, 0.0
    %v455 = vmax.f32 %v287, 0.0
    %v456 = vmax.f32 %v376, 0.0
    %v457 = vmax.f32 %v290, 0.0
    %v458 = vmax.f32 %v379, 0.0
    %v459 = vmax.f32 %v292, 0.0
    %v460 = vmax.f32 %v381, 0.0
    %v461 = vmax.f32 %v295, 0.0
    %v462 = vmax.f32 %v384, 0.0
    %v463 = vmax.f32 %v297, 0.0
    %v464 = vmax.f32 %v386, 0.0
    %v465 = vmax.f32 %v300, 0.0
    %v466 = vmax.f32 %v389, 0.0
    %v467 = vmax.f32 %v302, 0.0
    %v468 = vmax.f32 %v391, 0.0
    %v469 = vmax.f32 %v305, 0.0
    %v470 = vmax.f32 %v394, 0.0
    %v471 = vmax.f32 %v307, 0.0
    %v472 = vmax.f32 %v396, 0.0
    %v473 = vmax.f32 %v310, 0.0
    %v474 = vmax.f32 %v399, 0.0
    %v475 = vmax.f32 %v312, 0.0
    %v476 = vmax.f32 %v401, 0.0
    %v477 = vmax.f32 %v315, 0.0
    %v478 = vmax.f32 %v404, 0.0
    %v479 = vmax.f32 %v317, 0.0
    %v480 = vmax.f32 %v406, 0.0
    %v481 = vmax.f32 %v320, 0.0
    %v482 = vmax.f32 %v409, 0.0
    %v483 = vmax.f32 %v322, 0.0
    %v484 = vmax.f32 %v411, 0.0
    %v485 = vmax.f32 %v325, 0.0
    %v486 = vmax.f32 %v414, 0.0
    %v487 = vmax.f32 %v327, 0.0
    %v488 = vmax.f32 %v416, 0.0
    %v489 = vmax.f32 %v330, 0.0
    %v490 = vmax.f32 %v419, 0.0
    %v491 = vmax.f32 %v332, 0.0
    %v492 = vmax.f32 %v421, 0.0
    %v493 = vmax.f32 %v335, 0.0
    %v494 = vmax.f32 %v424, 0.0
    %v495 = vmax.f32 %v337, 0.0
    %v496 = vmax.f32 %v426, 0.0
    %v497 = vmax.f32 %v340, 0.0
    %v498 = vmax.f32 %v429, 0.0
    %v499 = vmax.f32 %v342, 0.0
    %v500 = vmax.f32 %v431, 0.0
    %v501 = vmax.f32 %v345, 0.0
    %v502 = vmax.f32 %v434, 0.0
    %v503 = vmax.f32 %v347, 0.0
    %v504 = vmax.f32 %v436, 0.0
    %v505 = vmax.f32 %v350, 0.0
    %v506 = vmax.f32 %v439, 0.0
    %v507 = vmax.f32 %v352, 0.0
    %v508 = vmax.f32 %v441, 0.0
    %v509 = vmax.f32 %v355, 0.0
    %v510 = vmax.f32 %v444, 0.0
    %v511 = vmax.f32 %v357, 0.0
    %v512 = vmax.f32 %v446, 0.0
    %v513 = vmax.f32 %v360, 0.0
    %v514 = vmax.f32 %v449, 0.0
    %v515 = vmax.f32 %v362, 0.0
    %v516 = vmax.f32 %v451, 0.0
    %v517 = vpack.c.bf16 %v455, %v453
    %v518 = vpack.c.bf16 %v456, %v454
    %v519 = vpack.c.bf16 %v459, %v457
    %v520 = vpack.c.bf16 %v460, %v458
    %v521 = vpack.c.bf16 %v463, %v461
    %v522 = vpack.c.bf16 %v464, %v462
    %v523 = vpack.c.bf16 %v467, %v465
    %v524 = vpack.c.bf16 %v468, %v466
    %v525 = vpack.c.bf16 %v471, %v469
    %v526 = vpack.c.bf16 %v472, %v470
    %v527 = vpack.c.bf16 %v475, %v473
    %v528 = vpack.c.bf16 %v476, %v474
    %v529 = vpack.c.bf16 %v479, %v477
    %v530 = vpack.c.bf16 %v480, %v478
    %v531 = vpack.c.bf16 %v483, %v481
    %v532 = vpack.c.bf16 %v484, %v482
    %v533 = vpack.c.bf16 %v487, %v485
    %v534 = vpack.c.bf16 %v488, %v486
    %v535 = vpack.c.bf16 %v491, %v489
    %v536 = vpack.c.bf16 %v492, %v490
    %v537 = vpack.c.bf16 %v495, %v493
    %v538 = vpack.c.bf16 %v496, %v494
    %v539 = vpack.c.bf16 %v499, %v497
    %v540 = vpack.c.bf16 %v500, %v498
    %v541 = vpack.c.bf16 %v503, %v501
    %v542 = vpack.c.bf16 %v504, %v502
    %v543 = vpack.c.bf16 %v507, %v505
    %v544 = vpack.c.bf16 %v508, %v506
    %v545 = vpack.c.bf16 %v511, %v509
    %v546 = vpack.c.bf16 %v512, %v510
    %v547 = vpack.c.bf16 %v515, %v513
    %v548 = vpack.c.bf16 %v516, %v514
    %v549 = vperm.slane %v139, 1
    %v550 = vperm.slane %v139, 5
    %v553 = vperm.slane %v549, 1
    %v554 = vperm.slane %v550, 1
    %v587 = vunpack.c.l.b16 %v75
    %v588 = vunpack.c.h.b16 %v75
    %v589 = vunpack.c.l.b16 %v76
    %v590 = vunpack.c.h.b16 %v76
    %v591 = vunpack.c.l.b16 %v77
    %v592 = vunpack.c.h.b16 %v77
    %v593 = vunpack.c.l.b16 %v78
    %v594 = vunpack.c.h.b16 %v78
    %v595 = vunpack.c.l.b16 %v79
    %v596 = vunpack.c.h.b16 %v79
    %v597 = vunpack.c.l.b16 %v80
    %v598 = vunpack.c.h.b16 %v80
    %v599 = vunpack.c.l.b16 %v81
    %v600 = vunpack.c.h.b16 %v81
    %v601 = vunpack.c.l.b16 %v82
    %v602 = vunpack.c.h.b16 %v82
    %v603 = vunpack.c.l.b16 %v83
    %v604 = vunpack.c.h.b16 %v83
    %v605 = vunpack.c.l.b16 %v84
    %v606 = vunpack.c.h.b16 %v84
    %v607 = vunpack.c.l.b16 %v85
    %v608 = vunpack.c.h.b16 %v85
    %v609 = vunpack.c.l.b16 %v86
    %v610 = vunpack.c.h.b16 %v86
    %v611 = vunpack.c.l.b16 %v87
    %v612 = vunpack.c.h.b16 %v87
    %v613 = vunpack.c.l.b16 %v88
    %v614 = vunpack.c.h.b16 %v88
    %v615 = vunpack.c.l.b16 %v89
    %v616 = vunpack.c.h.b16 %v89
    %v617 = vunpack.c.l.b16 %v90
    %v618 = vunpack.c.h.b16 %v90
    %v619 = vunpack.c.l.b16 %v91
    %v620 = vunpack.c.h.b16 %v91
    %v621 = vunpack.c.l.b16 %v92
    %v622 = vunpack.c.h.b16 %v92
    %v623 = vunpack.c.l.b16 %v93
    %v624 = vunpack.c.h.b16 %v93
    %v625 = vunpack.c.l.b16 %v94
    %v626 = vunpack.c.h.b16 %v94
    %v627 = vunpack.c.l.b16 %v95
    %v628 = vunpack.c.h.b16 %v95
    %v629 = vunpack.c.l.b16 %v96
    %v630 = vunpack.c.h.b16 %v96
    %v631 = vunpack.c.l.b16 %v97
    %v632 = vunpack.c.h.b16 %v97
    %v633 = vunpack.c.l.b16 %v98
    %v634 = vunpack.c.h.b16 %v98
    %v635 = vunpack.c.l.b16 %v99
    %v636 = vunpack.c.h.b16 %v99
    %v637 = vunpack.c.l.b16 %v100
    %v638 = vunpack.c.h.b16 %v100
    %v639 = vunpack.c.l.b16 %v101
    %v640 = vunpack.c.h.b16 %v101
    %v641 = vunpack.c.l.b16 %v102
    %v642 = vunpack.c.h.b16 %v102
    %v643 = vunpack.c.l.b16 %v103
    %v644 = vunpack.c.h.b16 %v103
    %v645 = vunpack.c.l.b16 %v104
    %v646 = vunpack.c.h.b16 %v104
    %v647 = vunpack.c.l.b16 %v105
    %v648 = vunpack.c.h.b16 %v105
    %v649 = vunpack.c.l.b16 %v106
    %v650 = vunpack.c.h.b16 %v106
    %v651 = vpack.c.b16 %v589, %v587
    %v652 = vpack.c.b16 %v590, %v588
    %v653 = vpack.c.b16 %v593, %v591
    %v654 = vpack.c.b16 %v594, %v592
    %v655 = vpack.c.b16 %v597, %v595
    %v656 = vpack.c.b16 %v598, %v596
    %v657 = vpack.c.b16 %v601, %v599
    %v658 = vpack.c.b16 %v602, %v600
    %v659 = vpack.c.b16 %v605, %v603
    %v660 = vpack.c.b16 %v606, %v604
    %v661 = vpack.c.b16 %v609, %v607
    %v662 = vpack.c.b16 %v610, %v608
    %v663 = vpack.c.b16 %v613, %v611
    %v664 = vpack.c.b16 %v614, %v612
    %v665 = vpack.c.b16 %v617, %v615
    %v666 = vpack.c.b16 %v618, %v616
    %v667 = vpack.c.b16 %v621, %v619
    %v668 = vpack.c.b16 %v622, %v620
    %v669 = vpack.c.b16 %v625, %v623
    %v670 = vpack.c.b16 %v626, %v624
    %v671 = vpack.c.b16 %v629, %v627
    %v672 = vpack.c.b16 %v630, %v628
    %v673 = vpack.c.b16 %v633, %v631
    %v674 = vpack.c.b16 %v634, %v632
    %v675 = vpack.c.b16 %v637, %v635
    %v676 = vpack.c.b16 %v638, %v636
    %v677 = vpack.c.b16 %v641, %v639
    %v678 = vpack.c.b16 %v642, %v640
    %v679 = vpack.c.b16 %v645, %v643
    %v680 = vpack.c.b16 %v646, %v644
    %v681 = vpack.c.b16 %v649, %v647
    %v682 = vpack.c.b16 %v650, %v648
    %715 = vmatpush.bf16.msra.mxu0 %v665
    %716 = vmatpush.bf16.msra.mxu0 %v663
    %717 = vmatpush.bf16.msra.mxu0 %v661
    %718 = vmatpush.bf16.msra.mxu0 %v659
    %719 = vmatpush.bf16.msra.mxu0 %v657
    %720 = vmatpush.bf16.msra.mxu0 %v655
    %721 = vmatpush.bf16.msra.mxu0 %v653
    %722 = vmatpush.bf16.msra.mxu0 %v651
    %723 = vmatmul.bf16.gmra.mxu0 %v517
    %v724 = vpop.f32.mrf.mxu0
    %v725 = vadd.f32 %v553, %v724
    %v726 = vpop.f32.mrf.mxu0
    %v727 = vadd.f32 %v553, %v726
    %728 = vmatmul.bf16.gmra.mxu0 %v519
    %v729 = vpop.f32.mrf.mxu0
    %v730 = vadd.f32 %v553, %v729
    %v731 = vpop.f32.mrf.mxu0
    %v732 = vadd.f32 %v553, %v731
    %733 = vmatmul.bf16.gmra.mxu0 %v521
    %v734 = vpop.f32.mrf.mxu0
    %v735 = vadd.f32 %v553, %v734
    %v736 = vpop.f32.mrf.mxu0
    %v737 = vadd.f32 %v553, %v736
    %738 = vmatmul.bf16.gmra.mxu0 %v523
    %v739 = vpop.f32.mrf.mxu0
    %v740 = vadd.f32 %v553, %v739
    %v741 = vpop.f32.mrf.mxu0
    %v742 = vadd.f32 %v553, %v741
    %743 = vmatmul.bf16.gmra.mxu0 %v525
    %v744 = vpop.f32.mrf.mxu0
    %v745 = vadd.f32 %v553, %v744
    %v746 = vpop.f32.mrf.mxu0
    %v747 = vadd.f32 %v553, %v746
    %748 = vmatmul.bf16.gmra.mxu0 %v527
    %v749 = vpop.f32.mrf.mxu0
    %v750 = vadd.f32 %v553, %v749
    %v751 = vpop.f32.mrf.mxu0
    %v752 = vadd.f32 %v553, %v751
    %753 = vmatmul.bf16.gmra.mxu0 %v529
    %v754 = vpop.f32.mrf.mxu0
    %v755 = vadd.f32 %v553, %v754
    %v756 = vpop.f32.mrf.mxu0
    %v757 = vadd.f32 %v553, %v756
    %758 = vmatmul.bf16.gmra.mxu0 %v531
    %v759 = vpop.f32.mrf.mxu0
    %v760 = vadd.f32 %v553, %v759
    %v761 = vpop.f32.mrf.mxu0
    %v762 = vadd.f32 %v553, %v761
    %763 = vmatmul.bf16.gmra.mxu0 %v533
    %v764 = vpop.f32.mrf.mxu0
    %v765 = vadd.f32 %v553, %v764
    %v766 = vpop.f32.mrf.mxu0
    %v767 = vadd.f32 %v553, %v766
    %768 = vmatmul.bf16.gmra.mxu0 %v535
    %v769 = vpop.f32.mrf.mxu0
    %v770 = vadd.f32 %v553, %v769
    %v771 = vpop.f32.mrf.mxu0
    %v772 = vadd.f32 %v553, %v771
    %773 = vmatmul.bf16.gmra.mxu0 %v537
    %v774 = vpop.f32.mrf.mxu0
    %v775 = vadd.f32 %v553, %v774
    %v776 = vpop.f32.mrf.mxu0
    %v777 = vadd.f32 %v553, %v776
    %778 = vmatmul.bf16.gmra.mxu0 %v539
    %v779 = vpop.f32.mrf.mxu0
    %v780 = vadd.f32 %v553, %v779
    %v781 = vpop.f32.mrf.mxu0
    %v782 = vadd.f32 %v553, %v781
    %783 = vmatmul.bf16.gmra.mxu0 %v541
    %v784 = vpop.f32.mrf.mxu0
    %v785 = vadd.f32 %v553, %v784
    %v786 = vpop.f32.mrf.mxu0
    %v787 = vadd.f32 %v553, %v786
    %788 = vmatmul.bf16.gmra.mxu0 %v543
    %v789 = vpop.f32.mrf.mxu0
    %v790 = vadd.f32 %v553, %v789
    %v791 = vpop.f32.mrf.mxu0
    %v792 = vadd.f32 %v553, %v791
    %793 = vmatmul.bf16.gmra.mxu0 %v545
    %v794 = vpop.f32.mrf.mxu0
    %v795 = vadd.f32 %v553, %v794
    %v796 = vpop.f32.mrf.mxu0
    %v797 = vadd.f32 %v553, %v796
    %798 = vmatmul.bf16.gmra.mxu0 %v547
    %v799 = vpop.f32.mrf.mxu0
    %v800 = vadd.f32 %v553, %v799
    %v801 = vpop.f32.mrf.mxu0
    %v802 = vadd.f32 %v553, %v801
    %803 = vdwg.mxu0
    %804 = vmatpush.bf16.msra.mxu0 %v681
    %805 = vmatpush.bf16.msra.mxu0 %v679
    %806 = vmatpush.bf16.msra.mxu0 %v677
    %807 = vmatpush.bf16.msra.mxu0 %v675
    %808 = vmatpush.bf16.msra.mxu0 %v673
    %809 = vmatpush.bf16.msra.mxu0 %v671
    %810 = vmatpush.bf16.msra.mxu0 %v669
    %811 = vmatpush.bf16.msra.mxu0 %v667
    %812 = vmatmul.bf16.gmra.mxu0 %v518
    %v813 = vpop.f32.mrf.mxu0
    %v814 = vadd.f32 %v725, %v813
    %v815 = vpop.f32.mrf.mxu0
    %v816 = vadd.f32 %v727, %v815
    %817 = vmatmul.bf16.gmra.mxu0 %v520
    %v818 = vpop.f32.mrf.mxu0
    %v819 = vadd.f32 %v730, %v818
    %v820 = vpop.f32.mrf.mxu0
    %v821 = vadd.f32 %v732, %v820
    %822 = vmatmul.bf16.gmra.mxu0 %v522
    %v823 = vpop.f32.mrf.mxu0
    %v824 = vadd.f32 %v735, %v823
    %v825 = vpop.f32.mrf.mxu0
    %v826 = vadd.f32 %v737, %v825
    %827 = vmatmul.bf16.gmra.mxu0 %v524
    %v828 = vpop.f32.mrf.mxu0
    %v829 = vadd.f32 %v740, %v828
    %v830 = vpop.f32.mrf.mxu0
    %v831 = vadd.f32 %v742, %v830
    %832 = vmatmul.bf16.gmra.mxu0 %v526
    %v833 = vpop.f32.mrf.mxu0
    %v834 = vadd.f32 %v745, %v833
    %v835 = vpop.f32.mrf.mxu0
    %v836 = vadd.f32 %v747, %v835
    %837 = vmatmul.bf16.gmra.mxu0 %v528
    %v838 = vpop.f32.mrf.mxu0
    %v839 = vadd.f32 %v750, %v838
    %v840 = vpop.f32.mrf.mxu0
    %v841 = vadd.f32 %v752, %v840
    %842 = vmatmul.bf16.gmra.mxu0 %v530
    %v843 = vpop.f32.mrf.mxu0
    %v844 = vadd.f32 %v755, %v843
    %v845 = vpop.f32.mrf.mxu0
    %v846 = vadd.f32 %v757, %v845
    %847 = vmatmul.bf16.gmra.mxu0 %v532
    %v848 = vpop.f32.mrf.mxu0
    %v849 = vadd.f32 %v760, %v848
    %v850 = vpop.f32.mrf.mxu0
    %v851 = vadd.f32 %v762, %v850
    %852 = vmatmul.bf16.gmra.mxu0 %v534
    %v853 = vpop.f32.mrf.mxu0
    %v854 = vadd.f32 %v765, %v853
    %v855 = vpop.f32.mrf.mxu0
    %v856 = vadd.f32 %v767, %v855
    %857 = vmatmul.bf16.gmra.mxu0 %v536
    %v858 = vpop.f32.mrf.mxu0
    %v859 = vadd.f32 %v770, %v858
    %v860 = vpop.f32.mrf.mxu0
    %v861 = vadd.f32 %v772, %v860
    %862 = vmatmul.bf16.gmra.mxu0 %v538
    %v863 = vpop.f32.mrf.mxu0
    %v864 = vadd.f32 %v775, %v863
    %v865 = vpop.f32.mrf.mxu0
    %v866 = vadd.f32 %v777, %v865
    %867 = vmatmul.bf16.gmra.mxu0 %v540
    %v868 = vpop.f32.mrf.mxu0
    %v869 = vadd.f32 %v780, %v868
    %v870 = vpop.f32.mrf.mxu0
    %v871 = vadd.f32 %v782, %v870
    %872 = vmatmul.bf16.gmra.mxu0 %v542
    %v873 = vpop.f32.mrf.mxu0
    %v874 = vadd.f32 %v785, %v873
    %v875 = vpop.f32.mrf.mxu0
    %v876 = vadd.f32 %v787, %v875
    %877 = vmatmul.bf16.gmra.mxu0 %v544
    %v878 = vpop.f32.mrf.mxu0
    %v879 = vadd.f32 %v790, %v878
    %v880 = vpop.f32.mrf.mxu0
    %v881 = vadd.f32 %v792, %v880
    %882 = vmatmul.bf16.gmra.mxu0 %v546
    %v883 = vpop.f32.mrf.mxu0
    %v884 = vadd.f32 %v795, %v883
    %v885 = vpop.f32.mrf.mxu0
    %v886 = vadd.f32 %v797, %v885
    %887 = vmatmul.bf16.gmra.mxu0 %v548
    %v888 = vpop.f32.mrf.mxu0
    %v889 = vadd.f32 %v800, %v888
    %v890 = vpop.f32.mrf.mxu0
    %v891 = vadd.f32 %v802, %v890
    %892 = vdwg.mxu0
    %893 = vmatpush.bf16.msra.mxu0 %v666
    %894 = vmatpush.bf16.msra.mxu0 %v664
    %895 = vmatpush.bf16.msra.mxu0 %v662
    %896 = vmatpush.bf16.msra.mxu0 %v660
    %897 = vmatpush.bf16.msra.mxu0 %v658
    %898 = vmatpush.bf16.msra.mxu0 %v656
    %899 = vmatpush.bf16.msra.mxu0 %v654
    %900 = vmatpush.bf16.msra.mxu0 %v652
    %901 = vmatmul.bf16.gmra.mxu0 %v517
    %v902 = vpop.f32.mrf.mxu0
    %v903 = vadd.f32 %v554, %v902
    %v904 = vpop.f32.mrf.mxu0
    %v905 = vadd.f32 %v554, %v904
    %906 = vmatmul.bf16.gmra.mxu0 %v519
    %v907 = vpop.f32.mrf.mxu0
    %v908 = vadd.f32 %v554, %v907
    %v909 = vpop.f32.mrf.mxu0
    %v910 = vadd.f32 %v554, %v909
    %911 = vmatmul.bf16.gmra.mxu0 %v521
    %v912 = vpop.f32.mrf.mxu0
    %v913 = vadd.f32 %v554, %v912
    %v914 = vpop.f32.mrf.mxu0
    %v915 = vadd.f32 %v554, %v914
    %916 = vmatmul.bf16.gmra.mxu0 %v523
    %v917 = vpop.f32.mrf.mxu0
    %v918 = vadd.f32 %v554, %v917
    %v919 = vpop.f32.mrf.mxu0
    %v920 = vadd.f32 %v554, %v919
    %921 = vmatmul.bf16.gmra.mxu0 %v525
    %v922 = vpop.f32.mrf.mxu0
    %v923 = vadd.f32 %v554, %v922
    %v924 = vpop.f32.mrf.mxu0
    %v925 = vadd.f32 %v554, %v924
    %926 = vmatmul.bf16.gmra.mxu0 %v527
    %v927 = vpop.f32.mrf.mxu0
    %v928 = vadd.f32 %v554, %v927
    %v929 = vpop.f32.mrf.mxu0
    %v930 = vadd.f32 %v554, %v929
    %931 = vmatmul.bf16.gmra.mxu0 %v529
    %v932 = vpop.f32.mrf.mxu0
    %v933 = vadd.f32 %v554, %v932
    %v934 = vpop.f32.mrf.mxu0
    %v935 = vadd.f32 %v554, %v934
    %936 = vmatmul.bf16.gmra.mxu0 %v531
    %v937 = vpop.f32.mrf.mxu0
    %v938 = vadd.f32 %v554, %v937
    %v939 = vpop.f32.mrf.mxu0
    %v940 = vadd.f32 %v554, %v939
    %941 = vmatmul.bf16.gmra.mxu0 %v533
    %v942 = vpop.f32.mrf.mxu0
    %v943 = vadd.f32 %v554, %v942
    %v944 = vpop.f32.mrf.mxu0
    %v945 = vadd.f32 %v554, %v944
    %946 = vmatmul.bf16.gmra.mxu0 %v535
    %v947 = vpop.f32.mrf.mxu0
    %v948 = vadd.f32 %v554, %v947
    %v949 = vpop.f32.mrf.mxu0
    %v950 = vadd.f32 %v554, %v949
    %951 = vmatmul.bf16.gmra.mxu0 %v537
    %v952 = vpop.f32.mrf.mxu0
    %v953 = vadd.f32 %v554, %v952
    %v954 = vpop.f32.mrf.mxu0
    %v955 = vadd.f32 %v554, %v954
    %956 = vmatmul.bf16.gmra.mxu0 %v539
    %v957 = vpop.f32.mrf.mxu0
    %v958 = vadd.f32 %v554, %v957
    %v959 = vpop.f32.mrf.mxu0
    %v960 = vadd.f32 %v554, %v959
    %961 = vmatmul.bf16.gmra.mxu0 %v541
    %v962 = vpop.f32.mrf.mxu0
    %v963 = vadd.f32 %v554, %v962
    %v964 = vpop.f32.mrf.mxu0
    %v965 = vadd.f32 %v554, %v964
    %966 = vmatmul.bf16.gmra.mxu0 %v543
    %v967 = vpop.f32.mrf.mxu0
    %v968 = vadd.f32 %v554, %v967
    %v969 = vpop.f32.mrf.mxu0
    %v970 = vadd.f32 %v554, %v969
    %971 = vmatmul.bf16.gmra.mxu0 %v545
    %v972 = vpop.f32.mrf.mxu0
    %v973 = vadd.f32 %v554, %v972
    %v974 = vpop.f32.mrf.mxu0
    %v975 = vadd.f32 %v554, %v974
    %976 = vmatmul.bf16.gmra.mxu0 %v547
    %v977 = vpop.f32.mrf.mxu0
    %v978 = vadd.f32 %v554, %v977
    %v979 = vpop.f32.mrf.mxu0
    %v980 = vadd.f32 %v554, %v979
    %981 = vdwg.mxu0
    %982 = vmatpush.bf16.msra.mxu0 %v682
    %983 = vmatpush.bf16.msra.mxu0 %v680
    %984 = vmatpush.bf16.msra.mxu0 %v678
    %985 = vmatpush.bf16.msra.mxu0 %v676
    %986 = vmatpush.bf16.msra.mxu0 %v674
    %987 = vmatpush.bf16.msra.mxu0 %v672
    %988 = vmatpush.bf16.msra.mxu0 %v670
    %989 = vmatpush.bf16.msra.mxu0 %v668
    %990 = vmatmul.bf16.gmra.mxu0 %v518
    %v991 = vpop.f32.mrf.mxu0
    %v992 = vadd.f32 %v903, %v991
    %v993 = vpop.f32.mrf.mxu0
    %v994 = vadd.f32 %v905, %v993
    %995 = vmatmul.bf16.gmra.mxu0 %v520
    %v996 = vpop.f32.mrf.mxu0
    %v997 = vadd.f32 %v908, %v996
    %v998 = vpop.f32.mrf.mxu0
    %v999 = vadd.f32 %v910, %v998
    %1000 = vmatmul.bf16.gmra.mxu0 %v522
    %v1001 = vpop.f32.mrf.mxu0
    %v1002 = vadd.f32 %v913, %v1001
    %v1003 = vpop.f32.mrf.mxu0
    %v1004 = vadd.f32 %v915, %v1003
    %1005 = vmatmul.bf16.gmra.mxu0 %v524
    %v1006 = vpop.f32.mrf.mxu0
    %v1007 = vadd.f32 %v918, %v1006
    %v1008 = vpop.f32.mrf.mxu0
    %v1009 = vadd.f32 %v920, %v1008
    %1010 = vmatmul.bf16.gmra.mxu0 %v526
    %v1011 = vpop.f32.mrf.mxu0
    %v1012 = vadd.f32 %v923, %v1011
    %v1013 = vpop.f32.mrf.mxu0
    %v1014 = vadd.f32 %v925, %v1013
    %1015 = vmatmul.bf16.gmra.mxu0 %v528
    %v1016 = vpop.f32.mrf.mxu0
    %v1017 = vadd.f32 %v928, %v1016
    %v1018 = vpop.f32.mrf.mxu0
    %v1019 = vadd.f32 %v930, %v1018
    %1020 = vmatmul.bf16.gmra.mxu0 %v530
    %v1021 = vpop.f32.mrf.mxu0
    %v1022 = vadd.f32 %v933, %v1021
    %v1023 = vpop.f32.mrf.mxu0
    %v1024 = vadd.f32 %v935, %v1023
    %1025 = vmatmul.bf16.gmra.mxu0 %v532
    %v1026 = vpop.f32.mrf.mxu0
    %v1027 = vadd.f32 %v938, %v1026
    %v1028 = vpop.f32.mrf.mxu0
    %v1029 = vadd.f32 %v940, %v1028
    %1030 = vmatmul.bf16.gmra.mxu0 %v534
    %v1031 = vpop.f32.mrf.mxu0
    %v1032 = vadd.f32 %v943, %v1031
    %v1033 = vpop.f32.mrf.mxu0
    %v1034 = vadd.f32 %v945, %v1033
    %1035 = vmatmul.bf16.gmra.mxu0 %v536
    %v1036 = vpop.f32.mrf.mxu0
    %v1037 = vadd.f32 %v948, %v1036
    %v1038 = vpop.f32.mrf.mxu0
    %v1039 = vadd.f32 %v950, %v1038
    %1040 = vmatmul.bf16.gmra.mxu0 %v538
    %v1041 = vpop.f32.mrf.mxu0
    %v1042 = vadd.f32 %v953, %v1041
    %v1043 = vpop.f32.mrf.mxu0
    %v1044 = vadd.f32 %v955, %v1043
    %1045 = vmatmul.bf16.gmra.mxu0 %v540
    %v1046 = vpop.f32.mrf.mxu0
    %v1047 = vadd.f32 %v958, %v1046
    %v1048 = vpop.f32.mrf.mxu0
    %v1049 = vadd.f32 %v960, %v1048
    %1050 = vmatmul.bf16.gmra.mxu0 %v542
    %v1051 = vpop.f32.mrf.mxu0
    %v1052 = vadd.f32 %v963, %v1051
    %v1053 = vpop.f32.mrf.mxu0
    %v1054 = vadd.f32 %v965, %v1053
    %1055 = vmatmul.bf16.gmra.mxu0 %v544
    %v1056 = vpop.f32.mrf.mxu0
    %v1057 = vadd.f32 %v968, %v1056
    %v1058 = vpop.f32.mrf.mxu0
    %v1059 = vadd.f32 %v970, %v1058
    %1060 = vmatmul.bf16.gmra.mxu0 %v546
    %v1061 = vpop.f32.mrf.mxu0
    %v1062 = vadd.f32 %v973, %v1061
    %v1063 = vpop.f32.mrf.mxu0
    %v1064 = vadd.f32 %v975, %v1063
    %1065 = vmatmul.bf16.gmra.mxu0 %v548
    %v1066 = vpop.f32.mrf.mxu0
    %v1067 = vadd.f32 %v978, %v1066
    %v1068 = vpop.f32.mrf.mxu0
    %v1069 = vadd.f32 %v980, %v1068
    %1070 = vdwg.mxu0
    %v1071 = vmax.f32 %v814, 0.0
    %v1072 = vmax.f32 %v992, 0.0
    %v1073 = vmax.f32 %v816, 0.0
    %v1074 = vmax.f32 %v994, 0.0
    %v1075 = vmax.f32 %v819, 0.0
    %v1076 = vmax.f32 %v997, 0.0
    %v1077 = vmax.f32 %v821, 0.0
    %v1078 = vmax.f32 %v999, 0.0
    %v1079 = vmax.f32 %v824, 0.0
    %v1080 = vmax.f32 %v1002, 0.0
    %v1081 = vmax.f32 %v826, 0.0
    %v1082 = vmax.f32 %v1004, 0.0
    %v1083 = vmax.f32 %v829, 0.0
    %v1084 = vmax.f32 %v1007, 0.0
    %v1085 = vmax.f32 %v831, 0.0
    %v1086 = vmax.f32 %v1009, 0.0
    %v1087 = vmax.f32 %v834, 0.0
    %v1088 = vmax.f32 %v1012, 0.0
    %v1089 = vmax.f32 %v836, 0.0
    %v1090 = vmax.f32 %v1014, 0.0
    %v1091 = vmax.f32 %v839, 0.0
    %v1092 = vmax.f32 %v1017, 0.0
    %v1093 = vmax.f32 %v841, 0.0
    %v1094 = vmax.f32 %v1019, 0.0
    %v1095 = vmax.f32 %v844, 0.0
    %v1096 = vmax.f32 %v1022, 0.0
    %v1097 = vmax.f32 %v846, 0.0
    %v1098 = vmax.f32 %v1024, 0.0
    %v1099 = vmax.f32 %v849, 0.0
    %v1100 = vmax.f32 %v1027, 0.0
    %v1101 = vmax.f32 %v851, 0.0
    %v1102 = vmax.f32 %v1029, 0.0
    %v1103 = vmax.f32 %v854, 0.0
    %v1104 = vmax.f32 %v1032, 0.0
    %v1105 = vmax.f32 %v856, 0.0
    %v1106 = vmax.f32 %v1034, 0.0
    %v1107 = vmax.f32 %v859, 0.0
    %v1108 = vmax.f32 %v1037, 0.0
    %v1109 = vmax.f32 %v861, 0.0
    %v1110 = vmax.f32 %v1039, 0.0
    %v1111 = vmax.f32 %v864, 0.0
    %v1112 = vmax.f32 %v1042, 0.0
    %v1113 = vmax.f32 %v866, 0.0
    %v1114 = vmax.f32 %v1044, 0.0
    %v1115 = vmax.f32 %v869, 0.0
    %v1116 = vmax.f32 %v1047, 0.0
    %v1117 = vmax.f32 %v871, 0.0
    %v1118 = vmax.f32 %v1049, 0.0
    %v1119 = vmax.f32 %v874, 0.0
    %v1120 = vmax.f32 %v1052, 0.0
    %v1121 = vmax.f32 %v876, 0.0
    %v1122 = vmax.f32 %v1054, 0.0
    %v1123 = vmax.f32 %v879, 0.0
    %v1124 = vmax.f32 %v1057, 0.0
    %v1125 = vmax.f32 %v881, 0.0
    %v1126 = vmax.f32 %v1059, 0.0
    %v1127 = vmax.f32 %v884, 0.0
    %v1128 = vmax.f32 %v1062, 0.0
    %v1129 = vmax.f32 %v886, 0.0
    %v1130 = vmax.f32 %v1064, 0.0
    %v1131 = vmax.f32 %v889, 0.0
    %v1132 = vmax.f32 %v1067, 0.0
    %v1133 = vmax.f32 %v891, 0.0
    %v1134 = vmax.f32 %v1069, 0.0
    %v1135 = vpack.c.bf16 %v1073, %v1071
    %v1136 = vpack.c.bf16 %v1074, %v1072
    %v1137 = vpack.c.bf16 %v1077, %v1075
    %v1138 = vpack.c.bf16 %v1078, %v1076
    %v1139 = vpack.c.bf16 %v1081, %v1079
    %v1140 = vpack.c.bf16 %v1082, %v1080
    %v1141 = vpack.c.bf16 %v1085, %v1083
    %v1142 = vpack.c.bf16 %v1086, %v1084
    %v1143 = vpack.c.bf16 %v1089, %v1087
    %v1144 = vpack.c.bf16 %v1090, %v1088
    %v1145 = vpack.c.bf16 %v1093, %v1091
    %v1146 = vpack.c.bf16 %v1094, %v1092
    %v1147 = vpack.c.bf16 %v1097, %v1095
    %v1148 = vpack.c.bf16 %v1098, %v1096
    %v1149 = vpack.c.bf16 %v1101, %v1099
    %v1150 = vpack.c.bf16 %v1102, %v1100
    %v1151 = vpack.c.bf16 %v1105, %v1103
    %v1152 = vpack.c.bf16 %v1106, %v1104
    %v1153 = vpack.c.bf16 %v1109, %v1107
    %v1154 = vpack.c.bf16 %v1110, %v1108
    %v1155 = vpack.c.bf16 %v1113, %v1111
    %v1156 = vpack.c.bf16 %v1114, %v1112
    %v1157 = vpack.c.bf16 %v1117, %v1115
    %v1158 = vpack.c.bf16 %v1118, %v1116
    %v1159 = vpack.c.bf16 %v1121, %v1119
    %v1160 = vpack.c.bf16 %v1122, %v1120
    %v1161 = vpack.c.bf16 %v1125, %v1123
    %v1162 = vpack.c.bf16 %v1126, %v1124
    %v1163 = vpack.c.bf16 %v1129, %v1127
    %v1164 = vpack.c.bf16 %v1130, %v1128
    %v1165 = vpack.c.bf16 %v1133, %v1131
    %v1166 = vpack.c.bf16 %v1134, %v1132
    %v1167 = vperm.slane %v139, 2
    %v1200 = vunpack.c.l.b16 %v107
    %v1201 = vunpack.c.l.b16 %v108
    %v1202 = vunpack.c.l.b16 %v109
    %v1203 = vunpack.c.l.b16 %v110
    %v1204 = vunpack.c.l.b16 %v111
    %v1205 = vunpack.c.l.b16 %v112
    %v1206 = vunpack.c.l.b16 %v113
    %v1207 = vunpack.c.l.b16 %v114
    %v1208 = vunpack.c.l.b16 %v115
    %v1209 = vunpack.c.l.b16 %v116
    %v1210 = vunpack.c.l.b16 %v117
    %v1211 = vunpack.c.l.b16 %v118
    %v1212 = vunpack.c.l.b16 %v119
    %v1213 = vunpack.c.l.b16 %v120
    %v1214 = vunpack.c.l.b16 %v121
    %v1215 = vunpack.c.l.b16 %v122
    %v1216 = vunpack.c.l.b16 %v123
    %v1217 = vunpack.c.l.b16 %v124
    %v1218 = vunpack.c.l.b16 %v125
    %v1219 = vunpack.c.l.b16 %v126
    %v1220 = vunpack.c.l.b16 %v127
    %v1221 = vunpack.c.l.b16 %v128
    %v1222 = vunpack.c.l.b16 %v129
    %v1223 = vunpack.c.l.b16 %v130
    %v1224 = vunpack.c.l.b16 %v131
    %v1225 = vunpack.c.l.b16 %v132
    %v1226 = vunpack.c.l.b16 %v133
    %v1227 = vunpack.c.l.b16 %v134
    %v1228 = vunpack.c.l.b16 %v135
    %v1229 = vunpack.c.l.b16 %v136
    %v1230 = vunpack.c.l.b16 %v137
    %v1231 = vunpack.c.l.b16 %v138
    %v1232 = vpack.c.b16 %v1201, %v1200
    %v1233 = vpack.c.b16 %v1203, %v1202
    %v1234 = vpack.c.b16 %v1205, %v1204
    %v1235 = vpack.c.b16 %v1207, %v1206
    %v1236 = vpack.c.b16 %v1209, %v1208
    %v1237 = vpack.c.b16 %v1211, %v1210
    %v1238 = vpack.c.b16 %v1213, %v1212
    %v1239 = vpack.c.b16 %v1215, %v1214
    %v1240 = vpack.c.b16 %v1217, %v1216
    %v1241 = vpack.c.b16 %v1219, %v1218
    %v1242 = vpack.c.b16 %v1221, %v1220
    %v1243 = vpack.c.b16 %v1223, %v1222
    %v1244 = vpack.c.b16 %v1225, %v1224
    %v1245 = vpack.c.b16 %v1227, %v1226
    %v1246 = vpack.c.b16 %v1229, %v1228
    %v1247 = vpack.c.b16 %v1231, %v1230
    %1264 = vmatpush.bf16.msra.mxu0 %v1239
    %1265 = vmatpush.bf16.msra.mxu0 %v1238
    %1266 = vmatpush.bf16.msra.mxu0 %v1237
    %1267 = vmatpush.bf16.msra.mxu0 %v1236
    %1268 = vmatpush.bf16.msra.mxu0 %v1235
    %1269 = vmatpush.bf16.msra.mxu0 %v1234
    %1270 = vmatpush.bf16.msra.mxu0 %v1233
    %1271 = vmatpush.bf16.msra.mxu0 %v1232
    %1272 = vmatmul.bf16.gmra.mxu0 %v1135
    %v1273 = vpop.f32.mrf.mxu0
    %v1274 = vadd.f32 %v1167, %v1273
    %v1275 = vpop.f32.mrf.mxu0
    %v1276 = vadd.f32 %v1167, %v1275
    %1277 = vmatmul.bf16.gmra.mxu0 %v1137
    %v1278 = vpop.f32.mrf.mxu0
    %v1279 = vadd.f32 %v1167, %v1278
    %v1280 = vpop.f32.mrf.mxu0
    %v1281 = vadd.f32 %v1167, %v1280
    %1282 = vmatmul.bf16.gmra.mxu0 %v1139
    %v1283 = vpop.f32.mrf.mxu0
    %v1284 = vadd.f32 %v1167, %v1283
    %v1285 = vpop.f32.mrf.mxu0
    %v1286 = vadd.f32 %v1167, %v1285
    %1287 = vmatmul.bf16.gmra.mxu0 %v1141
    %v1288 = vpop.f32.mrf.mxu0
    %v1289 = vadd.f32 %v1167, %v1288
    %v1290 = vpop.f32.mrf.mxu0
    %v1291 = vadd.f32 %v1167, %v1290
    %1292 = vmatmul.bf16.gmra.mxu0 %v1143
    %v1293 = vpop.f32.mrf.mxu0
    %v1294 = vadd.f32 %v1167, %v1293
    %v1295 = vpop.f32.mrf.mxu0
    %v1296 = vadd.f32 %v1167, %v1295
    %1297 = vmatmul.bf16.gmra.mxu0 %v1145
    %v1298 = vpop.f32.mrf.mxu0
    %v1299 = vadd.f32 %v1167, %v1298
    %v1300 = vpop.f32.mrf.mxu0
    %v1301 = vadd.f32 %v1167, %v1300
    %1302 = vmatmul.bf16.gmra.mxu0 %v1147
    %v1303 = vpop.f32.mrf.mxu0
    %v1304 = vadd.f32 %v1167, %v1303
    %v1305 = vpop.f32.mrf.mxu0
    %v1306 = vadd.f32 %v1167, %v1305
    %1307 = vmatmul.bf16.gmra.mxu0 %v1149
    %v1308 = vpop.f32.mrf.mxu0
    %v1309 = vadd.f32 %v1167, %v1308
    %v1310 = vpop.f32.mrf.mxu0
    %v1311 = vadd.f32 %v1167, %v1310
    %1312 = vmatmul.bf16.gmra.mxu0 %v1151
    %v1313 = vpop.f32.mrf.mxu0
    %v1314 = vadd.f32 %v1167, %v1313
    %v1315 = vpop.f32.mrf.mxu0
    %v1316 = vadd.f32 %v1167, %v1315
    %1317 = vmatmul.bf16.gmra.mxu0 %v1153
    %v1318 = vpop.f32.mrf.mxu0
    %v1319 = vadd.f32 %v1167, %v1318
    %v1320 = vpop.f32.mrf.mxu0
    %v1321 = vadd.f32 %v1167, %v1320
    %1322 = vmatmul.bf16.gmra.mxu0 %v1155
    %v1323 = vpop.f32.mrf.mxu0
    %v1324 = vadd.f32 %v1167, %v1323
    %v1325 = vpop.f32.mrf.mxu0
    %v1326 = vadd.f32 %v1167, %v1325
    %1327 = vmatmul.bf16.gmra.mxu0 %v1157
    %v1328 = vpop.f32.mrf.mxu0
    %v1329 = vadd.f32 %v1167, %v1328
    %v1330 = vpop.f32.mrf.mxu0
    %v1331 = vadd.f32 %v1167, %v1330
    %1332 = vmatmul.bf16.gmra.mxu0 %v1159
    %v1333 = vpop.f32.mrf.mxu0
    %v1334 = vadd.f32 %v1167, %v1333
    %v1335 = vpop.f32.mrf.mxu0
    %v1336 = vadd.f32 %v1167, %v1335
    %1337 = vmatmul.bf16.gmra.mxu0 %v1161
    %v1338 = vpop.f32.mrf.mxu0
    %v1339 = vadd.f32 %v1167, %v1338
    %v1340 = vpop.f32.mrf.mxu0
    %v1341 = vadd.f32 %v1167, %v1340
    %1342 = vmatmul.bf16.gmra.mxu0 %v1163
    %v1343 = vpop.f32.mrf.mxu0
    %v1344 = vadd.f32 %v1167, %v1343
    %v1345 = vpop.f32.mrf.mxu0
    %v1346 = vadd.f32 %v1167, %v1345
    %1347 = vmatmul.bf16.gmra.mxu0 %v1165
    %v1348 = vpop.f32.mrf.mxu0
    %v1349 = vadd.f32 %v1167, %v1348
    %v1350 = vpop.f32.mrf.mxu0
    %v1351 = vadd.f32 %v1167, %v1350
    %1352 = vdwg.mxu0
    %1353 = vmatpush.bf16.msra.mxu0 %v1247
    %1354 = vmatpush.bf16.msra.mxu0 %v1246
    %1355 = vmatpush.bf16.msra.mxu0 %v1245
    %1356 = vmatpush.bf16.msra.mxu0 %v1244
    %1357 = vmatpush.bf16.msra.mxu0 %v1243
    %1358 = vmatpush.bf16.msra.mxu0 %v1242
    %1359 = vmatpush.bf16.msra.mxu0 %v1241
    %1360 = vmatpush.bf16.msra.mxu0 %v1240
    %1361 = vmatmul.bf16.gmra.mxu0 %v1136
    %v1362 = vpop.f32.mrf.mxu0
    %v1363 = vadd.f32 %v1274, %v1362
    %v1364 = vpop.f32.mrf.mxu0
    %v1365 = vadd.f32 %v1276, %v1364
    %1366 = vmatmul.bf16.gmra.mxu0 %v1138
    %v1367 = vpop.f32.mrf.mxu0
    %v1368 = vadd.f32 %v1279, %v1367
    %v1369 = vpop.f32.mrf.mxu0
    %v1370 = vadd.f32 %v1281, %v1369
    %1371 = vmatmul.bf16.gmra.mxu0 %v1140
    %v1372 = vpop.f32.mrf.mxu0
    %v1373 = vadd.f32 %v1284, %v1372
    %v1374 = vpop.f32.mrf.mxu0
    %v1375 = vadd.f32 %v1286, %v1374
    %1376 = vmatmul.bf16.gmra.mxu0 %v1142
    %v1377 = vpop.f32.mrf.mxu0
    %v1378 = vadd.f32 %v1289, %v1377
    %v1379 = vpop.f32.mrf.mxu0
    %v1380 = vadd.f32 %v1291, %v1379
    %1381 = vmatmul.bf16.gmra.mxu0 %v1144
    %v1382 = vpop.f32.mrf.mxu0
    %v1383 = vadd.f32 %v1294, %v1382
    %v1384 = vpop.f32.mrf.mxu0
    %v1385 = vadd.f32 %v1296, %v1384
    %1386 = vmatmul.bf16.gmra.mxu0 %v1146
    %v1387 = vpop.f32.mrf.mxu0
    %v1388 = vadd.f32 %v1299, %v1387
    %v1389 = vpop.f32.mrf.mxu0
    %v1390 = vadd.f32 %v1301, %v1389
    %1391 = vmatmul.bf16.gmra.mxu0 %v1148
    %v1392 = vpop.f32.mrf.mxu0
    %v1393 = vadd.f32 %v1304, %v1392
    %v1394 = vpop.f32.mrf.mxu0
    %v1395 = vadd.f32 %v1306, %v1394
    %1396 = vmatmul.bf16.gmra.mxu0 %v1150
    %v1397 = vpop.f32.mrf.mxu0
    %v1398 = vadd.f32 %v1309, %v1397
    %v1399 = vpop.f32.mrf.mxu0
    %v1400 = vadd.f32 %v1311, %v1399
    %1401 = vmatmul.bf16.gmra.mxu0 %v1152
    %v1402 = vpop.f32.mrf.mxu0
    %v1403 = vadd.f32 %v1314, %v1402
    %v1404 = vpop.f32.mrf.mxu0
    %v1405 = vadd.f32 %v1316, %v1404
    %1406 = vmatmul.bf16.gmra.mxu0 %v1154
    %v1407 = vpop.f32.mrf.mxu0
    %v1408 = vadd.f32 %v1319, %v1407
    %v1409 = vpop.f32.mrf.mxu0
    %v1410 = vadd.f32 %v1321, %v1409
    %1411 = vmatmul.bf16.gmra.mxu0 %v1156
    %v1412 = vpop.f32.mrf.mxu0
    %v1413 = vadd.f32 %v1324, %v1412
    %v1414 = vpop.f32.mrf.mxu0
    %v1415 = vadd.f32 %v1326, %v1414
    %1416 = vmatmul.bf16.gmra.mxu0 %v1158
    %v1417 = vpop.f32.mrf.mxu0
    %v1418 = vadd.f32 %v1329, %v1417
    %v1419 = vpop.f32.mrf.mxu0
    %v1420 = vadd.f32 %v1331, %v1419
    %1421 = vmatmul.bf16.gmra.mxu0 %v1160
    %v1422 = vpop.f32.mrf.mxu0
    %v1423 = vadd.f32 %v1334, %v1422
    %v1424 = vpop.f32.mrf.mxu0
    %v1425 = vadd.f32 %v1336, %v1424
    %1426 = vmatmul.bf16.gmra.mxu0 %v1162
    %v1427 = vpop.f32.mrf.mxu0
    %v1428 = vadd.f32 %v1339, %v1427
    %v1429 = vpop.f32.mrf.mxu0
    %v1430 = vadd.f32 %v1341, %v1429
    %1431 = vmatmul.bf16.gmra.mxu0 %v1164
    %v1432 = vpop.f32.mrf.mxu0
    %v1433 = vadd.f32 %v1344, %v1432
    %v1434 = vpop.f32.mrf.mxu0
    %v1435 = vadd.f32 %v1346, %v1434
    %1436 = vmatmul.bf16.gmra.mxu0 %v1166
    %v1437 = vpop.f32.mrf.mxu0
    %v1438 = vadd.f32 %v1349, %v1437
    %v1439 = vpop.f32.mrf.mxu0
    %v1440 = vadd.f32 %v1351, %v1439
    %1441 = vdwg.mxu0
    %v1442 = vlaneseq
    %v1443 = vand.u32 %v1442, 127
    %vm1444 = vcmp.lt.s32.totalorder %v1443, 8
    %v1445 = vmul.f32 %v1363, 1.442695
    %v1446 = vpow.pop %v1445
    %v1447 = vmul.f32 %v1365, 1.442695
    %v1448 = vpow.pop %v1447
    %v1449 = vmul.f32 %v1368, 1.442695
    %v1450 = vpow.pop %v1449
    %v1451 = vmul.f32 %v1370, 1.442695
    %v1452 = vpow.pop %v1451
    %v1453 = vmul.f32 %v1373, 1.442695
    %v1454 = vpow.pop %v1453
    %v1455 = vmul.f32 %v1375, 1.442695
    %v1456 = vpow.pop %v1455
    %v1457 = vmul.f32 %v1378, 1.442695
    %v1458 = vpow.pop %v1457
    %v1459 = vmul.f32 %v1380, 1.442695
    %v1460 = vpow.pop %v1459
    %v1461 = vmul.f32 %v1383, 1.442695
    %v1462 = vpow.pop %v1461
    %v1463 = vmul.f32 %v1385, 1.442695
    %v1464 = vpow.pop %v1463
    %v1465 = vmul.f32 %v1388, 1.442695
    %v1466 = vpow.pop %v1465
    %v1467 = vmul.f32 %v1390, 1.442695
    %v1468 = vpow.pop %v1467
    %v1469 = vmul.f32 %v1393, 1.442695
    %v1470 = vpow.pop %v1469
    %v1471 = vmul.f32 %v1395, 1.442695
    %v1472 = vpow.pop %v1471
    %v1473 = vmul.f32 %v1398, 1.442695
    %v1474 = vpow.pop %v1473
    %v1475 = vmul.f32 %v1400, 1.442695
    %v1476 = vpow.pop %v1475
    %v1477 = vmul.f32 %v1403, 1.442695
    %v1478 = vpow.pop %v1477
    %v1479 = vmul.f32 %v1405, 1.442695
    %v1480 = vpow.pop %v1479
    %v1481 = vmul.f32 %v1408, 1.442695
    %v1482 = vpow.pop %v1481
    %v1483 = vmul.f32 %v1410, 1.442695
    %v1484 = vpow.pop %v1483
    %v1485 = vmul.f32 %v1413, 1.442695
    %v1486 = vpow.pop %v1485
    %v1487 = vmul.f32 %v1415, 1.442695
    %v1488 = vpow.pop %v1487
    %v1489 = vmul.f32 %v1418, 1.442695
    %v1490 = vpow.pop %v1489
    %v1491 = vmul.f32 %v1420, 1.442695
    %v1492 = vpow.pop %v1491
    %v1493 = vmul.f32 %v1423, 1.442695
    %v1494 = vpow.pop %v1493
    %v1495 = vmul.f32 %v1425, 1.442695
    %v1496 = vpow.pop %v1495
    %v1497 = vmul.f32 %v1428, 1.442695
    %v1498 = vpow.pop %v1497
    %v1499 = vmul.f32 %v1430, 1.442695
    %v1500 = vpow.pop %v1499
    %v1501 = vmul.f32 %v1433, 1.442695
    %v1502 = vpow.pop %v1501
    %v1503 = vmul.f32 %v1435, 1.442695
    %v1504 = vpow.pop %v1503
    %v1505 = vmul.f32 %v1438, 1.442695
    %v1506 = vpow.pop %v1505
    %v1507 = vmul.f32 %v1440, 1.442695
    %v1508 = vpow.pop %v1507
    %v1509 = vsel %vm1444, %v1363, %v1446
    %v1510 = vsel %vm1444, %v1365, %v1448
    %v1511 = vsel %vm1444, %v1368, %v1450
    %v1512 = vsel %vm1444, %v1370, %v1452
    %v1513 = vsel %vm1444, %v1373, %v1454
    %v1514 = vsel %vm1444, %v1375, %v1456
    %v1515 = vsel %vm1444, %v1378, %v1458
    %v1516 = vsel %vm1444, %v1380, %v1460
    %v1517 = vsel %vm1444, %v1383, %v1462
    %v1518 = vsel %vm1444, %v1385, %v1464
    %v1519 = vsel %vm1444, %v1388, %v1466
    %v1520 = vsel %vm1444, %v1390, %v1468
    %v1521 = vsel %vm1444, %v1393, %v1470
    %v1522 = vsel %vm1444, %v1395, %v1472
    %v1523 = vsel %vm1444, %v1398, %v1474
    %v1524 = vsel %vm1444, %v1400, %v1476
    %v1525 = vsel %vm1444, %v1403, %v1478
    %v1526 = vsel %vm1444, %v1405, %v1480
    %v1527 = vsel %vm1444, %v1408, %v1482
    %v1528 = vsel %vm1444, %v1410, %v1484
    %v1529 = vsel %vm1444, %v1413, %v1486
    %v1530 = vsel %vm1444, %v1415, %v1488
    %v1531 = vsel %vm1444, %v1418, %v1490
    %v1532 = vsel %vm1444, %v1420, %v1492
    %v1533 = vsel %vm1444, %v1423, %v1494
    %v1534 = vsel %vm1444, %v1425, %v1496
    %v1535 = vsel %vm1444, %v1428, %v1498
    %v1536 = vsel %vm1444, %v1430, %v1500
    %v1537 = vsel %vm1444, %v1433, %v1502
    %v1538 = vsel %vm1444, %v1435, %v1504
    %v1539 = vsel %vm1444, %v1438, %v1506
    %v1540 = vsel %vm1444, %v1440, %v1508
    %1541 = vst [vmem:[%s3] sm:$0xff] %v1509
    %1542 = vst [vmem:[%s3 + $0x8] sm:$0xff] %v1510
    %1543 = vst [vmem:[%s3 + $0x10] sm:$0xff] %v1511
    %1544 = vst [vmem:[%s3 + $0x18] sm:$0xff] %v1512
    %1545 = vst [vmem:[%s3 + $0x20] sm:$0xff] %v1513
    %1546 = vst [vmem:[%s3 + $0x28] sm:$0xff] %v1514
    %1547 = vst [vmem:[%s3 + $0x30] sm:$0xff] %v1515
    %1548 = vst [vmem:[%s3 + $0x38] sm:$0xff] %v1516
    %1549 = vst [vmem:[%s3 + $0x40] sm:$0xff] %v1517
    %1550 = vst [vmem:[%s3 + $0x48] sm:$0xff] %v1518
    %1551 = vst [vmem:[%s3 + $0x50] sm:$0xff] %v1519
    %1552 = vst [vmem:[%s3 + $0x58] sm:$0xff] %v1520
    %1553 = vst [vmem:[%s3 + $0x60] sm:$0xff] %v1521
    %1554 = vst [vmem:[%s3 + $0x68] sm:$0xff] %v1522
    %1555 = vst [vmem:[%s3 + $0x70] sm:$0xff] %v1523
    %1556 = vst [vmem:[%s3 + $0x78] sm:$0xff] %v1524
    %1557 = vst [vmem:[%s3 + $0x80] sm:$0xff] %v1525
    %1558 = vst [vmem:[%s3 + $0x88] sm:$0xff] %v1526
    %1559 = vst [vmem:[%s3 + $0x90] sm:$0xff] %v1527
    %1560 = vst [vmem:[%s3 + $0x98] sm:$0xff] %v1528
    %1561 = vst [vmem:[%s3 + $0xa0] sm:$0xff] %v1529
    %1562 = vst [vmem:[%s3 + $0xa8] sm:$0xff] %v1530
    %1563 = vst [vmem:[%s3 + $0xb0] sm:$0xff] %v1531
    %1564 = vst [vmem:[%s3 + $0xb8] sm:$0xff] %v1532
    %1565 = vst [vmem:[%s3 + $0xc0] sm:$0xff] %v1533
    %1566 = vst [vmem:[%s3 + $0xc8] sm:$0xff] %v1534
    %1567 = vst [vmem:[%s3 + $0xd0] sm:$0xff] %v1535
    %1568 = vst [vmem:[%s3 + $0xd8] sm:$0xff] %v1536
    %1569 = vst [vmem:[%s3 + $0xe0] sm:$0xff] %v1537
    %1570 = vst [vmem:[%s3 + $0xe8] sm:$0xff] %v1538
    %1571 = vst [vmem:[%s3 + $0xf0] sm:$0xff] %v1539
    %1572 = vst [vmem:[%s3 + $0xf8] sm:$0xff] %v1540
    // Predicated region
    $region26: #{policy_network_forward.1} parent=1 // pred_check
      _
    $region27: #{policy_network_forward.1} parent=1 // pred_check_branch
      %1574 = sbr.rel (0) target = $region29
    $region28: #{policy_network_forward.1} parent=1 // pred_region
      _
    $region29: #{policy_network_forward.1} parent=1 // pred_fallthru
      _
    // Predicated region
    $region30: #{policy_network_forward.1} parent=1 // pred_check
      _
    $region31: #{policy_network_forward.1} parent=1 // pred_check_branch
      %1576 = sbr.rel (0) target = $region33
    $region32: #{policy_network_forward.1} parent=1 // pred_region
      _
    $region33: #{policy_network_forward.1} parent=1 // pred_fallthru
      _
    %1577 = vsyncpa [#allocation3], 1
    %1578 = vsyncpa [#allocation5], 1

</llo_original>
